<compile_context>
chip_gen: v7x
topology: tpu7x:2x2x1
jax: 0.10.0
libtpu: 0.0.40
codegen_flags: <defaults>
</compile_context>

<pallas_src>
import functools

import jax
import jax.numpy as jnp
from jax.experimental import pallas as pl
from jax.experimental.pallas import tpu as pltpu


def _round_up(x, m):
    return ((x + m - 1) // m) * m


def _mixprop_kernel(a_t_ref, w_ref, b_ref, x_ref, o_ref, *, gdep, alpha,
                    matmul_dtype):
    # a_t_ref: (Vp, Vp)            (1-alpha) * row-normalized (adj+I), transposed
    # w_ref  : (gdep+1, c_out, C)  1x1-conv weight, pre-split per hop
    # b_ref  : (c_out, 1)          bias
    # x_ref  : (1, C, tl, Vp)      one (batch, L-tile) block
    # o_ref  : (1, c_out, tl, Vp)

    def mm(lhs, rhs, dims):
        if matmul_dtype is not None:
            lhs = lhs.astype(matmul_dtype)
            rhs = rhs.astype(matmul_dtype)
        return jax.lax.dot_general(lhs, rhs, (dims, ((), ())),
                                   preferred_element_type=jnp.float32)

    a_t = a_t_ref[...]                    # (Vp, Vp), already (1-alpha)-scaled
    x = x_ref[0]                          # (C, tl, Vp)  -- no eager upcast

    # hop 0 contribution to the 1x1 conv:  (c_out, C) . (C, tl, Vp)
    acc = mm(w_ref[0], x, ((1,), (0,)))   # (c_out, tl, Vp) f32

    # alpha * x computed once (f32), reused every hop.
    ax = alpha * x.astype(jnp.float32)

    h = x
    for k in range(1, gdep + 1):
        # graph propagation (damping folded into a_t):
        #   (C, tl, W) . (W, Vp) -> (C, tl, Vp), f32
        h = ax + mm(h, a_t, ((2,), (0,)))
        # fused channel mix for this hop
        acc = acc + mm(w_ref[k], h, ((1,), (0,)))

    acc = acc + b_ref[...][:, :, None]    # (c_out, 1, 1) broadcast
    o_ref[...] = acc[None].astype(o_ref.dtype)


def mixprop_forward(x_ncvl, adj, weight, bias, *, gdep, alpha,
                    tl_target=128, matmul_dtype=None):
    """x_ncvl: (N, C, V, L); adj: (V, V); weight: (c_out, (gdep+1)*C); bias: (c_out,)."""
    N, C, V, L = x_ncvl.shape
    c_out, c_in_tot = weight.shape
    assert c_in_tot == (gdep + 1) * C

    # --- hoisted adjacency normalization (done once, not per grid step) ---
    adj_f = adj.astype(jnp.float32) + jnp.eye(V, dtype=jnp.float32)
    a = adj_f / jnp.sum(adj_f, axis=1, keepdims=True)      # (V, V), a[v, w]
    a_t = (1.0 - alpha) * a.T                               # (w, v), damping folded in

    # --- padding for lane-dense V and 8-aligned L tiles ---
    Vp = _round_up(V, 128)
    L8 = _round_up(L, 8)
    tl = min(L8, _round_up(tl_target, 8))
    Lp = _round_up(L, tl)

    a_t_p = jnp.zeros((Vp, Vp), jnp.float32).at[:V, :V].set(a_t)
    x = jnp.transpose(x_ncvl, (0, 1, 3, 2))                 # (N, C, L, V)
    x = jnp.pad(x, ((0, 0), (0, 0), (0, Lp - L), (0, Vp - V)))

    # per-hop weight slices: (c_out, (gdep+1)*C) -> (gdep+1, c_out, C)
    w3 = jnp.transpose(weight.reshape(c_out, gdep + 1, C), (1, 0, 2))
    b2 = bias.reshape(c_out, 1)

    grid = (N, Lp // tl)

    itemsize = x.dtype.itemsize
    vmem_est = (
        2 * C * tl * Vp * itemsize            # x block, double-buffered
        + 2 * c_out * tl * Vp * itemsize      # out block, double-buffered
        + Vp * Vp * 4                         # a_t (grid-resident)
        + (gdep + 1) * c_out * C * 4 + c_out * 4
        + (2 * C + c_out) * tl * Vp * 4       # live f32 temporaries (h, ax, acc)
    )
    vmem_limit = int(min(max(2 * vmem_est, 16 * 1024 * 1024), 48 * 1024 * 1024))

    flops = 2 * N * gdep * C * Lp * Vp * Vp + 2 * N * (gdep + 1) * c_out * C * Lp * Vp
    bytes_accessed = (x.size + N * c_out * Lp * Vp) * itemsize + (
        Vp * Vp + (gdep + 1) * c_out * C + c_out) * 4

    out = pl.pallas_call(
        functools.partial(_mixprop_kernel, gdep=gdep, alpha=alpha,
                          matmul_dtype=matmul_dtype),
        out_shape=jax.ShapeDtypeStruct((N, c_out, Lp, Vp), x.dtype),
        grid=grid,
        in_specs=[
            pl.BlockSpec((Vp, Vp), lambda n, l: (0, 0)),
            pl.BlockSpec((gdep + 1, c_out, C), lambda n, l: (0, 0, 0)),
            pl.BlockSpec((c_out, 1), lambda n, l: (0, 0)),
            pl.BlockSpec((1, C, tl, Vp), lambda n, l: (n, 0, l, 0)),
        ],
        out_specs=pl.BlockSpec((1, c_out, tl, Vp), lambda n, l: (n, 0, l, 0)),
        compiler_params=pltpu.CompilerParams(
            dimension_semantics=("parallel", "parallel"),
            vmem_limit_bytes=vmem_limit),
        cost_estimate=pl.CostEstimate(flops=flops, transcendentals=0,
                                      bytes_accessed=bytes_accessed),
    )(a_t_p, w3, b2, x)

    # strip padding, back to PyTorch layout (N, c_out, V, L)
    return jnp.transpose(out[:, :, :L, :V], (0, 1, 3, 2))


def mixprop_reference(x, adj, weight, bias, *, gdep, alpha):
    """Pure-JAX reference mirroring the PyTorch module."""
    V = adj.shape[0]
    adj = adj + jnp.eye(V, dtype=adj.dtype)
    d = adj.sum(1)
    a = adj / d[:, None]
    h = x
    outs = [h]
    for _ in range(gdep):
        h = alpha * x + (1.0 - alpha) * jnp.einsum('ncwl,vw->ncvl', h, a)
        outs.append(h)
    ho = jnp.concatenate(outs, axis=1)
    out = jnp.einsum('oi,nivl->novl', weight, ho)
    return out + bias[None, :, None, None]


if __name__ == "__main__":
    # Small, deterministic example shapes consistent with the module.
    N, C_IN, V, L = 2, 4, 16, 8
    GDEP, C_OUT = 2, 8
    ALPHA = 0.05
    # TODO(synk): BayesConv2d samples weights from N(mu, sigma) each forward;
    # here we use deterministic weights (the "mu" parameters) instead.
    # (self.dropout is unused in the module's forward, so it is omitted.)

    key = jax.random.PRNGKey(0)
    kx, ka, kw, kb = jax.random.split(key, 4)

    x = jax.random.normal(kx, (N, C_IN, V, L), dtype=jnp.float32)
    adj = jax.random.uniform(ka, (V, V), dtype=jnp.float32)
    weight = 0.1 * jax.random.normal(kw, (C_OUT, (GDEP + 1) * C_IN),
                                     dtype=jnp.float32)
    bias = 0.1 * jax.random.normal(kb, (C_OUT,), dtype=jnp.float32)

    out = mixprop_forward(x, adj, weight, bias, gdep=GDEP, alpha=ALPHA)
    out = jax.block_until_ready(out)

    ref = mixprop_reference(x, adj, weight, bias, gdep=GDEP, alpha=ALPHA)
    assert out.shape == (N, C_OUT, V, L), out.shape
    assert jnp.allclose(out, ref, rtol=1e-5, atol=1e-5), (
        float(jnp.max(jnp.abs(out - ref))))

    print("KERNEL_OK")
</pallas_src>

<mosaic_0001>
module attributes {stable_mosaic.version = 11 : i64} {
  func.func @_mixprop_kernel(%arg0: i32, %arg1: i32, %arg2: memref<128x128xf32, #tpu.memory_space<vmem>>, %arg3: memref<3x8x4xf32, #tpu.memory_space<vmem>>, %arg4: memref<8x1xf32, #tpu.memory_space<vmem>>, %arg5: memref<1x4x8x128xf32, #tpu.memory_space<vmem>>, %arg6: memref<1x8x8x128xf32, #tpu.memory_space<vmem>>) attributes {dimension_semantics = [#tpu.dimension_semantics<parallel>, #tpu.dimension_semantics<parallel>], iteration_bounds = array<i64: 2, 1>, scalar_prefetch = 0 : i64, scratch_operands = 0 : i64, tpu.core_type = #tpu.core_type<tc>, window_params = [{pipeline_mode = #tpu.pipeline_mode<synchronous>, transform_indices = @transform_0, window_bounds = array<i64: 128, 128>}, {pipeline_mode = #tpu.pipeline_mode<synchronous>, transform_indices = @transform_1, window_bounds = array<i64: 3, 8, 4>}, {pipeline_mode = #tpu.pipeline_mode<synchronous>, transform_indices = @transform_2, window_bounds = array<i64: 8, 1>}, {transform_indices = @transform_3, window_bounds = array<i64: 1, 4, 8, 128>}, {transform_indices = @transform_4, window_bounds = array<i64: 1, 8, 8, 128>}]} {
    %c0 = arith.constant 0 : index
    %c0_0 = arith.constant 0 : index
    %0 = vector.load %arg2[%c0, %c0_0] : memref<128x128xf32, #tpu.memory_space<vmem>>, vector<128x128xf32>
    %c0_1 = arith.constant 0 : index
    %c0_2 = arith.constant 0 : index
    %c0_3 = arith.constant 0 : index
    %c0_4 = arith.constant 0 : index
    %1 = vector.load %arg5[%c0_1, %c0_2, %c0_3, %c0_4] : memref<1x4x8x128xf32, #tpu.memory_space<vmem>>, vector<1x4x8x128xf32>
    %2 = vector.shape_cast %1 : vector<1x4x8x128xf32> to vector<4x8x128xf32>
    %c0_5 = arith.constant 0 : index
    %c0_6 = arith.constant 0 : index
    %c0_7 = arith.constant 0 : index
    %3 = vector.load %arg3[%c0_5, %c0_6, %c0_7] : memref<3x8x4xf32, #tpu.memory_space<vmem>>, vector<1x8x4xf32>
    %4 = vector.shape_cast %3 : vector<1x8x4xf32> to vector<8x4xf32>
    %cst = arith.constant dense<0.000000e+00> : vector<8x8x128xf32>
    %5 = tpu.matmul %4, %2, %cst {dimension_numbers = #tpu.dot_dimension_numbers<[1], [0], [0], [1, 2], [0, 0, 1, 1, 1, 2], [], []>} : vector<8x4xf32>, vector<4x8x128xf32>, vector<8x8x128xf32> -> vector<8x8x128xf32>
    %cst_8 = arith.constant 5.000000e-02 : f32
    %6 = vector.broadcast %cst_8 : f32 to vector<4x8x128xf32>
    %7 = arith.mulf %6, %2 : vector<4x8x128xf32>
    %cst_9 = arith.constant dense<0.000000e+00> : vector<4x8x128xf32>
    %8 = tpu.matmul %2, %0, %cst_9 {dimension_numbers = #tpu.dot_dimension_numbers<[2], [0], [0, 1], [1], [0, 0, 0, 1, 1, 1], [], []>} : vector<4x8x128xf32>, vector<128x128xf32>, vector<4x8x128xf32> -> vector<4x8x128xf32>
    %9 = arith.addf %7, %8 : vector<4x8x128xf32>
    %c1 = arith.constant 1 : index
    %c0_10 = arith.constant 0 : index
    %c0_11 = arith.constant 0 : index
    %10 = vector.load %arg3[%c1, %c0_10, %c0_11] : memref<3x8x4xf32, #tpu.memory_space<vmem>>, vector<1x8x4xf32>
    %11 = vector.shape_cast %10 : vector<1x8x4xf32> to vector<8x4xf32>
    %cst_12 = arith.constant dense<0.000000e+00> : vector<8x8x128xf32>
    %12 = tpu.matmul %11, %9, %cst_12 {dimension_numbers = #tpu.dot_dimension_numbers<[1], [0], [0], [1, 2], [0, 0, 1, 1, 1, 2], [], []>} : vector<8x4xf32>, vector<4x8x128xf32>, vector<8x8x128xf32> -> vector<8x8x128xf32>
    %13 = arith.addf %5, %12 : vector<8x8x128xf32>
    %cst_13 = arith.constant dense<0.000000e+00> : vector<4x8x128xf32>
    %14 = tpu.matmul %9, %0, %cst_13 {dimension_numbers = #tpu.dot_dimension_numbers<[2], [0], [0, 1], [1], [0, 0, 0, 1, 1, 1], [], []>} : vector<4x8x128xf32>, vector<128x128xf32>, vector<4x8x128xf32> -> vector<4x8x128xf32>
    %15 = arith.addf %7, %14 : vector<4x8x128xf32>
    %c2 = arith.constant 2 : index
    %c0_14 = arith.constant 0 : index
    %c0_15 = arith.constant 0 : index
    %16 = vector.load %arg3[%c2, %c0_14, %c0_15] : memref<3x8x4xf32, #tpu.memory_space<vmem>>, vector<1x8x4xf32>
    %17 = vector.shape_cast %16 : vector<1x8x4xf32> to vector<8x4xf32>
    %cst_16 = arith.constant dense<0.000000e+00> : vector<8x8x128xf32>
    %18 = tpu.matmul %17, %15, %cst_16 {dimension_numbers = #tpu.dot_dimension_numbers<[1], [0], [0], [1, 2], [0, 0, 1, 1, 1, 2], [], []>} : vector<8x4xf32>, vector<4x8x128xf32>, vector<8x8x128xf32> -> vector<8x8x128xf32>
    %19 = arith.addf %13, %18 : vector<8x8x128xf32>
    %c0_17 = arith.constant 0 : index
    %c0_18 = arith.constant 0 : index
    %20 = vector.load %arg4[%c0_17, %c0_18] : memref<8x1xf32, #tpu.memory_space<vmem>>, vector<8x1xf32>
    %21 = vector.shape_cast %20 : vector<8x1xf32> to vector<8x1x1xf32>
    %22 = vector.broadcast %21 : vector<8x1x1xf32> to vector<8x8x128xf32>
    %23 = arith.addf %19, %22 : vector<8x8x128xf32>
    %24 = vector.shape_cast %23 : vector<8x8x128xf32> to vector<1x8x8x128xf32>
    %c0_19 = arith.constant 0 : index
    %c0_20 = arith.constant 0 : index
    %c0_21 = arith.constant 0 : index
    %c0_22 = arith.constant 0 : index
    %25 = vector.load %arg6[%c0_19, %c0_20, %c0_21, %c0_22] : memref<1x8x8x128xf32, #tpu.memory_space<vmem>>, vector<1x8x8x128xf32>
    tpu.vector_store %arg6[%c0_19, %c0_20, %c0_21, %c0_22], %24 {strides = array<i32>} : memref<1x8x8x128xf32, #tpu.memory_space<vmem>>, vector<1x8x8x128xf32>,
    return
  }
  func.func @transform_0(%arg0: i32, %arg1: i32) -> (i32, i32) {
    %c0_i32 = arith.constant 0 : i32
    %c0_i32_0 = arith.constant 0 : i32
    %c0_i32_1 = arith.constant 0 : i32
    return %c0_i32, %c0_i32_0 : i32, i32
  }
  func.func @transform_1(%arg0: i32, %arg1: i32) -> (i32, i32, i32) {
    %c0_i32 = arith.constant 0 : i32
    %c0_i32_0 = arith.constant 0 : i32
    %c0_i32_1 = arith.constant 0 : i32
    %c0_i32_2 = arith.constant 0 : i32
    return %c0_i32, %c0_i32_0, %c0_i32_1 : i32, i32, i32
  }
  func.func @transform_2(%arg0: i32, %arg1: i32) -> (i32, i32) {
    %c0_i32 = arith.constant 0 : i32
    %c0_i32_0 = arith.constant 0 : i32
    %c0_i32_1 = arith.constant 0 : i32
    return %c0_i32, %c0_i32_0 : i32, i32
  }
  func.func @transform_3(%arg0: i32, %arg1: i32) -> (i32, i32, i32, i32) {
    %c0_i32 = arith.constant 0 : i32
    %c0_i32_0 = arith.constant 0 : i32
    %c0_i32_1 = arith.constant 0 : i32
    return %arg0, %c0_i32, %arg1, %c0_i32_0 : i32, i32, i32, i32
  }
  func.func @transform_4(%arg0: i32, %arg1: i32) -> (i32, i32, i32, i32) {
    %c0_i32 = arith.constant 0 : i32
    %c0_i32_0 = arith.constant 0 : i32
    %c0_i32_1 = arith.constant 0 : i32
    return %arg0, %c0_i32, %arg1, %c0_i32_0 : i32, i32, i32, i32
  }
}

</mosaic_0001>

<llo_original>
// kernel: tpu_custom_call.1
$region0: #{tpu_custom_call.1}
  #allocation0 [shape = 'u32[]', space=smem, size = 0x4, offset = 0x4, fixed_abs, tag = 'smem constant byte address 0x4 - core index']
  #allocation1 [shape = 'u32[144,128]{1,0:T(1,128)}', space=vmem, size = 0x12000, scoped, tag = 'internal scratch']
  %s0 = inlined_call_operand.hbm [shape: f32[128,128], index: 0, kind: input, shape index: {}]
  %s1 = inlined_call_operand.vmem [shape: f32[3,8,4], index: 1, kind: input, shape index: {}]
  %s2 = inlined_call_operand.vmem [shape: f32[8,1], index: 2, kind: input, shape index: {}]
  %s3 = inlined_call_operand.hbm [shape: f32[2,4,8,128], index: 3, kind: input, shape index: {}]
  %s4 = inlined_call_operand.hbm [shape: f32[2,8,8,128], index: 4, kind: output, shape index: {}]
  %s5 = sld [smem:[#allocation0]]
  $region57: #{tpu_custom_call.1} parent=0
    _
  %s7 = ssub.s32 1, %s5
  %s8 = scalar_select 0, %s7, %s5
  $region1: #{tpu_custom_call.1} parent=0
    #allocation2 [shape = 'u8[65536]{0}', space=vmem, size = 0x10000, scoped, tag = 'input window, operand 0, single buffered']
    #allocation3 [shape = 's32[2]{0}', space=sflag, size = 0x8, scoped, tag = 'scoped memory for tpu_custom_call.1']
    #allocation4 [shape = 's32[2]{0}', space=sflag, size = 0x8, scoped, tag = 'scoped memory for tpu_custom_call.1']
    #allocation5 [shape = 'u8[32768]{0}', space=vmem, size = 0x8000, scoped, tag = 'input window, operand 3']
    #allocation6 [shape = 's32[2]{0}', space=sflag, size = 0x8, scoped, tag = 'scoped memory for tpu_custom_call.1']
    #allocation7 [shape = 'u8[65536]{0}', space=vmem, size = 0x10000, scoped, tag = 'output window, operand 0']
    %9 = vsyncpa [#allocation3], 0
    %10 = vsyncpa [#allocation6], 0
    %s11 = scalar_lea.sflag [#allocation6], 1
    %12 = vsyncpa %s11, 0
    %13 = vsyncpa [#allocation4], 0
    %s14 = scalar_lea.sflag [#allocation4], 1
    %15 = vsyncpa %s14, 0
    loop: start=0, step=1, limit=4
    $region2: #{tpu_custom_call.1} parent=1 // loop_pre_header
      _
    $region3: #{tpu_custom_call.1} parent=1 // loop_header
      %s17 = sphi 0, %s21
      %p18 = scmp.ge.s32.totalorder %s17, 4
      %s24 = sphi 0, %s36
      %s25 = sphi 0, %s32
      %s26 = sphi 0, %s24
      %s27 = sphi 0, %s25
      %s28 = sphi 0, %s26
      %s29 = sphi 0, %s27
      %s37 = sphi 0, %s37
      %s39 = sphi 0, %s37
      %s40 = sphi 0, %s39
      %s54 = sphi 0, %s40
      %s58 = sphi 0, %s58
      %s60 = sphi 0, %s58
      %s61 = sphi 0, %s60
      %s75 = sphi 0, %s61
      %s79 = sphi 0, %s79
      %s81 = sphi 0, %s79
      %s82 = sphi 0, %s81
      %s96 = sphi 0, %s82
      %s104 = sphi 0, %s106
      %s107 = sphi 0, %s104
      %s108 = sphi 0, %s107
      %s124 = sphi 0, %s108
      %s132 = sphi 0, %s134
      %s135 = sphi 0, %s132
      %s136 = sphi 0, %s135
      %s152 = sphi 0, %s136
    $region4: #{tpu_custom_call.1} parent=1 // loop_header_branch
      %20 = sbr.rel (%p18) target = $region8
    $region5: #{tpu_custom_call.1} parent=1 // loop_body
      %s22 = ssub.s32 %s17, 1
      %s23 = ssub.s32 %s17, 2
      %s30 = sadd.s32 1, %s25
      %p31 = scmp.ge.s32.totalorder %s30, 1
      %s32 = scalar_select %p31, 0, %s30
      %s33 = sadd.s32 1, %s24
      %s34 = scalar_select %p31, %s33, %s24
      %p35 = scmp.ge.s32.totalorder %s34, 2
      %s36 = scalar_select %p35, 0, %s34
      %s38 = sadd.s32 %s37, 1
      %p41 = scmp.eq.s32.totalorder %s17, 1
      %p42 = scmp.ne.s32.totalorder %s37, %s39
      %p43 = scmp.eq.s32.totalorder %s17, 0
      %p44 = por %p42, %p43
      %p45 = scmp.ne.s32.totalorder %s37, %s39
      %p46 = scmp.eq.s32.totalorder %s22, 1
      %p47 = por %p45, %p46
      %p48 = scmp.ne.s32.totalorder %s39, %s40
      %p49 = scmp.eq.s32.totalorder %s22, 0
      %p50 = por %p48, %p49
      %p51 = scmp.ne.s32.totalorder %s39, %s40
      %p52 = scmp.eq.s32.totalorder %s23, 1
      %p53 = por %p51, %p52
      %p55 = scmp.ne.s32.totalorder %s40, %s54
      %p56 = scmp.eq.s32.totalorder %s23, 0
      %p57 = por %p55, %p56
      %s59 = sadd.s32 %s58, 1
      %p62 = scmp.eq.s32.totalorder %s17, 1
      %p63 = scmp.ne.s32.totalorder %s58, %s60
      %p64 = scmp.eq.s32.totalorder %s17, 0
      %p65 = por %p63, %p64
      %p66 = scmp.ne.s32.totalorder %s58, %s60
      %p67 = scmp.eq.s32.totalorder %s22, 1
      %p68 = por %p66, %p67
      %p69 = scmp.ne.s32.totalorder %s60, %s61
      %p70 = scmp.eq.s32.totalorder %s22, 0
      %p71 = por %p69, %p70
      %p72 = scmp.ne.s32.totalorder %s60, %s61
      %p73 = scmp.eq.s32.totalorder %s23, 1
      %p74 = por %p72, %p73
      %p76 = scmp.ne.s32.totalorder %s61, %s75
      %p77 = scmp.eq.s32.totalorder %s23, 0
      %p78 = por %p76, %p77
      %s80 = sadd.s32 %s79, 1
      %p83 = scmp.eq.s32.totalorder %s17, 1
      %p84 = scmp.ne.s32.totalorder %s79, %s81
      %p85 = scmp.eq.s32.totalorder %s17, 0
      %p86 = por %p84, %p85
      %p87 = scmp.ne.s32.totalorder %s79, %s81
      %p88 = scmp.eq.s32.totalorder %s22, 1
      %p89 = por %p87, %p88
      %p90 = scmp.ne.s32.totalorder %s81, %s82
      %p91 = scmp.eq.s32.totalorder %s22, 0
      %p92 = por %p90, %p91
      %p93 = scmp.ne.s32.totalorder %s81, %s82
      %p94 = scmp.eq.s32.totalorder %s23, 1
      %p95 = por %p93, %p94
      %p97 = scmp.ne.s32.totalorder %s82, %s96
      %p98 = scmp.eq.s32.totalorder %s23, 0
      %p99 = por %p97, %p98
      %s100 = ssub.s32 %s24, %s36
      %s101 = ssub.s32 %s25, %s32
      %s102 = sor.u32 %s100, %s101
      %p103 = scmp.eq.s32.totalorder %s102, 0
      %s105 = sadd.s32 %s104, 1
      %s106 = scalar_select %p103, %s104, %s105
      %p109 = pneg %p103
      %p110 = scmp.eq.s32.totalorder %s17, 1
      %p111 = por %p109, %p110
      %p112 = scmp.ne.s32.totalorder %s104, %s107
      %p113 = scmp.eq.s32.totalorder %s17, 0
      %p114 = por %p112, %p113
      %p115 = scmp.ne.s32.totalorder %s104, %s107
      %p116 = scmp.eq.s32.totalorder %s22, 1
      %p117 = por %p115, %p116
      %p118 = scmp.ne.s32.totalorder %s107, %s108
      %p119 = scmp.eq.s32.totalorder %s22, 0
      %p120 = por %p118, %p119
      %p121 = scmp.ne.s32.totalorder %s107, %s108
      %p122 = scmp.eq.s32.totalorder %s23, 1
      %p123 = por %p121, %p122
      %p125 = scmp.ne.s32.totalorder %s108, %s124
      %p126 = scmp.eq.s32.totalorder %s23, 0
      %p127 = por %p125, %p126
      %s128 = ssub.s32 %s24, %s36
      %s129 = ssub.s32 %s25, %s32
      %s130 = sor.u32 %s128, %s129
      %p131 = scmp.eq.s32.totalorder %s130, 0
      %s133 = sadd.s32 %s132, 1
      %s134 = scalar_select %p131, %s132, %s133
      %p137 = pneg %p131
      %p138 = scmp.eq.s32.totalorder %s17, 1
      %p139 = por %p137, %p138
      %p140 = scmp.ne.s32.totalorder %s132, %s135
      %p141 = scmp.eq.s32.totalorder %s17, 0
      %p142 = por %p140, %p141
      %p143 = scmp.ne.s32.totalorder %s132, %s135
      %p144 = scmp.eq.s32.totalorder %s22, 1
      %p145 = por %p143, %p144
      %p146 = scmp.ne.s32.totalorder %s135, %s136
      %p147 = scmp.eq.s32.totalorder %s22, 0
      %p148 = por %p146, %p147
      %p149 = scmp.ne.s32.totalorder %s135, %s136
      %p150 = scmp.eq.s32.totalorder %s23, 1
      %p151 = por %p149, %p150
      %p153 = scmp.ne.s32.totalorder %s136, %s152
      %p154 = scmp.eq.s32.totalorder %s23, 0
      %p155 = por %p153, %p154
      %p156 = scmp.le.s32.totalorder 1, %s17
      %p157 = scmp.lt.s32.totalorder %s17, 3
      %p158 = pnand %p156, %p157
      %p159 = pneg %p158
      // Predicated region
      $region9: #{tpu_custom_call.1} parent=5 // pred_check
        _
      $region10: #{tpu_custom_call.1} parent=5 // pred_check_branch
        %161 = sbr.rel (%p158) target = $region12
      $region11: #{tpu_custom_call.1} parent=5 // pred_region
        %s162 = ssub.s32 %s17, 1
        // Predicated region
        $region13: #{tpu_custom_call.1} parent=11 // pred_check
          %p163 = pneg %p50
        $region14: #{tpu_custom_call.1} parent=11 // pred_check_branch
          %165 = sbr.rel (%p163) target = $region16
        $region15: #{tpu_custom_call.1} parent=11 // pred_region
          %s167 = ssub.s32 2048, 2048
          %168 = vsyncadd [#allocation3], %s167
          %s169 = sshll.u32 [#allocation2], 4
          %s170 = int_to_ptr.vmem [resolvable:$true] %s169
          %175 = dma.hbm_to_vmem [thread:$0]  %s0, 2048, %s170, [#allocation3], 128, 128, 8
        $region16: #{tpu_custom_call.1} parent=11 // pred_fallthru
          _
        // Predicated region
        $region17: #{tpu_custom_call.1} parent=11 // pred_check
          %p176 = pneg %p71
        $region18: #{tpu_custom_call.1} parent=11 // pred_check_branch
          %178 = sbr.rel (%p176) target = $region20
        $region19: #{tpu_custom_call.1} parent=11 // pred_region
          _
        $region20: #{tpu_custom_call.1} parent=11 // pred_fallthru
          _
        // Predicated region
        $region21: #{tpu_custom_call.1} parent=11 // pred_check
          %p179 = pneg %p92
        $region22: #{tpu_custom_call.1} parent=11 // pred_check_branch
          %181 = sbr.rel (%p179) target = $region24
        $region23: #{tpu_custom_call.1} parent=11 // pred_region
          _
        $region24: #{tpu_custom_call.1} parent=11 // pred_fallthru
          _
      $region12: #{tpu_custom_call.1} parent=5 // pred_fallthru
        _
      %p182 = scmp.lt.s32.totalorder %s17, 2
      // Predicated region
      $region25: #{tpu_custom_call.1} parent=5 // pred_check
        %p183 = pneg %p182
      $region26: #{tpu_custom_call.1} parent=5 // pred_check_branch
        %185 = sbr.rel (%p183) target = $region28
      $region27: #{tpu_custom_call.1} parent=5 // pred_region
        // Predicated region
        $region29: #{tpu_custom_call.1} parent=27 // pred_check
          %p186 = pneg %p114
        $region30: #{tpu_custom_call.1} parent=27 // pred_check_branch
          %188 = sbr.rel (%p186) target = $region32
        $region31: #{tpu_custom_call.1} parent=27 // pred_region
          %s189 = sand.u32 %s104, 1
          %s190 = scalar_lea.sflag [#allocation6], %s189
          %s191 = sand.u32 %s104, 1
          %s192 = smul.addr %s191, 32
          %s193 = scalar_lea.vmem [#allocation5], %s192
          %s195 = ssub.s32 512, 512
          %196 = vsyncadd %s190, %s195
          %s197 = smul.addr %s24, 4
          %s198 = sadd.s32 %s25, %s197
          %s199 = smul.addr %s198, 128
          %s200 = scalar_lea.hbm %s3, %s199
          %s201 = sshll.u32 %s193, 4
          %s202 = int_to_ptr.vmem [resolvable:$true] %s201
          %207 = dma.hbm_to_vmem [thread:$0]  %s200, 512, %s202, %s190, 128, 128, 8
        $region32: #{tpu_custom_call.1} parent=27 // pred_fallthru
          _
      $region28: #{tpu_custom_call.1} parent=5 // pred_fallthru
        _
      %p208 = scmp.le.s32.totalorder 1, %s17
      %p209 = scmp.lt.s32.totalorder %s17, 3
      %p210 = pnand %p208, %p209
      %p211 = pneg %p210
      // Predicated region
      $region33: #{tpu_custom_call.1} parent=5 // pred_check
        _
      $region34: #{tpu_custom_call.1} parent=5 // pred_check_branch
        %213 = sbr.rel (%p210) target = $region36
      $region35: #{tpu_custom_call.1} parent=5 // pred_region
        %s214 = ssub.s32 %s17, 1
        // Predicated region
        $region37: #{tpu_custom_call.1} parent=35 // pred_check
          %p215 = pneg %p50
        $region38: #{tpu_custom_call.1} parent=35 // pred_check_branch
          %217 = sbr.rel (%p215) target = $region40
        $region39: #{tpu_custom_call.1} parent=35 // pred_region
          %218 = dma.done [#allocation3], 2048
        $region40: #{tpu_custom_call.1} parent=35 // pred_fallthru
          _
        %s219 = sand.u32 %s107, 1
        %s220 = scalar_lea.sflag [#allocation6], %s219
        %s221 = sand.u32 %s107, 1
        %s222 = smul.addr %s221, 32
        %s223 = scalar_lea.vmem [#allocation5], %s222
        // Predicated region
        $region41: #{tpu_custom_call.1} parent=35 // pred_check
          %p224 = pneg %p120
        $region42: #{tpu_custom_call.1} parent=35 // pred_check_branch
          %226 = sbr.rel (%p224) target = $region44
        $region43: #{tpu_custom_call.1} parent=35 // pred_region
          %227 = dma.done %s220, 512
        $region44: #{tpu_custom_call.1} parent=35 // pred_fallthru
          _
        %p228 = pneg %p50
        %p229 = pneg %p47
        %p230 = pneg %p71
        %p231 = pneg %p68
        %p232 = pneg %p92
        %p233 = pneg %p89
        %s234 = sand.u32 %s107, 1
        %s235 = scalar_lea.sflag [#allocation6], %s234
        %s236 = sand.u32 %s107, 1
        %s237 = smul.addr %s236, 32
        %s238 = scalar_lea.vmem [#allocation5], %s237
        %p239 = pneg %p120
        %p240 = pneg %p117
        %p241 = pneg %p148
        %p242 = pneg %p145
        %s243 = sand.u32 %s135, 1
        %s244 = scalar_lea.sflag [#allocation4], %s243
        %s245 = sand.u32 %s135, 1
        %s246 = smul.addr %s245, 64
        %s247 = scalar_lea.vmem [#allocation7], %s246
        %v248 = vld [vmem:[#allocation2] sm:$0xff]
        %v249 = vld [vmem:[#allocation2 + $0x8] sm:$0xff]
        %v250 = vld [vmem:[#allocation2 + $0x10] sm:$0xff]
        %v251 = vld [vmem:[#allocation2 + $0x18] sm:$0xff]
        %v252 = vld [vmem:[#allocation2 + $0x20] sm:$0xff]
        %v253 = vld [vmem:[#allocation2 + $0x28] sm:$0xff]
        %v254 = vld [vmem:[#allocation2 + $0x30] sm:$0xff]
        %v255 = vld [vmem:[#allocation2 + $0x38] sm:$0xff]
        %v256 = vld [vmem:[#allocation2 + $0x40] sm:$0xff]
        %v257 = vld [vmem:[#allocation2 + $0x48] sm:$0xff]
        %v258 = vld [vmem:[#allocation2 + $0x50] sm:$0xff]
        %v259 = vld [vmem:[#allocation2 + $0x58] sm:$0xff]
        %v260 = vld [vmem:[#allocation2 + $0x60] sm:$0xff]
        %v261 = vld [vmem:[#allocation2 + $0x68] sm:$0xff]
        %v262 = vld [vmem:[#allocation2 + $0x70] sm:$0xff]
        %v263 = vld [vmem:[#allocation2 + $0x78] sm:$0xff]
        %v264 = vld [vmem:[%s223] sm:$0xff]
        %v265 = vld [vmem:[%s223 + $0x8] sm:$0xff]
        %v266 = vld [vmem:[%s223 + $0x10] sm:$0xff]
        %v267 = vld [vmem:[%s223 + $0x18] sm:$0xff]
        %v268 = vld [vmem:[%s1] sm:$0xff]
        %v269 = vmul.f32 %v264, 0.05
        %v270 = vmul.f32 %v265, 0.05
        %v271 = vmul.f32 %v266, 0.05
        %v272 = vmul.f32 %v267, 0.05
        %273 = vmatprep.subr.mxu0 0.0
        %274 = vmatpush1.msra.mxu0 %v248
        %275 = vmatprep.subr.mxu0 0.0
        %276 = vmatpush1.msra.mxu0 %v249
        %277 = vmatprep.subr.mxu0 0.0
        %278 = vmatpush1.msra.mxu0 %v250
        %279 = vmatprep.subr.mxu0 0.0
        %280 = vmatpush1.msra.mxu0 %v251
        %281 = vmatprep.subr.mxu0 0.0
        %282 = vmatpush1.msra.mxu0 %v252
        %283 = vmatprep.subr.mxu0 0.0
        %284 = vmatpush1.msra.mxu0 %v253
        %285 = vmatprep.subr.mxu0 0.0
        %286 = vmatpush1.msra.mxu0 %v254
        %287 = vmatprep.subr.mxu0 0.0
        %288 = vmatpush1.msra.mxu0 %v255
        %289 = vmatprep.subr.mxu0 0.0
        %290 = vmatpush1.msra.mxu0 %v256
        %291 = vmatprep.subr.mxu0 0.0
        %292 = vmatpush1.msra.mxu0 %v257
        %293 = vmatprep.subr.mxu0 0.0
        %294 = vmatpush1.msra.mxu0 %v258
        %295 = vmatprep.subr.mxu0 0.0
        %296 = vmatpush1.msra.mxu0 %v259
        %297 = vmatprep.subr.mxu0 0.0
        %298 = vmatpush1.msra.mxu0 %v260
        %299 = vmatprep.subr.mxu0 0.0
        %300 = vmatpush1.msra.mxu0 %v261
        %301 = vmatprep.subr.mxu0 0.0
        %302 = vmatpush1.msra.mxu0 %v262
        %303 = vmatprep.subr.mxu0 0.0
        %304 = vmatpush1.msra.mxu0 %v263
        %305 = vmatprep.subr.mxu0 0.0
        %306 = vmatpush1.msra.mxu0 0.0
        %307 = vmatprep.subr.mxu0 0.0
        %308 = vmatpush1.msra.mxu0 0.0
        %309 = vmatprep.subr.mxu0 0.0
        %310 = vmatpush1.msra.mxu0 0.0
        %311 = vmatprep.subr.mxu0 0.0
        %312 = vmatpush1.msra.mxu0 0.0
        %313 = vmatprep.subr.mxu0 0.0
        %314 = vmatpush1.msra.mxu0 0.0
        %315 = vmatprep.subr.mxu0 0.0
        %316 = vmatpush1.msra.mxu0 0.0
        %317 = vmatprep.subr.mxu0 0.0
        %318 = vmatpush1.msra.mxu0 0.0
        %319 = vmatprep.subr.mxu0 0.0
        %320 = vmatpush1.msra.mxu0 0.0
        %321 = vmatprep.subr.mxu0 0.0
        %322 = vmatpush1.msra.mxu0 0.0
        %323 = vmatprep.subr.mxu0 0.0
        %324 = vmatpush1.msra.mxu0 0.0
        %325 = vmatprep.subr.mxu0 0.0
        %326 = vmatpush1.msra.mxu0 0.0
        %327 = vmatprep.subr.mxu0 0.0
        %328 = vmatpush1.msra.mxu0 0.0
        %329 = vmatprep.subr.mxu0 0.0
        %330 = vmatpush1.msra.mxu0 0.0
        %331 = vmatprep.subr.mxu0 0.0
        %332 = vmatpush1.msra.mxu0 0.0
        %333 = vmatprep.subr.mxu0 0.0
        %334 = vmatpush1.msra.mxu0 0.0
        %335 = vmatprep.subr.mxu0 0.0
        %336 = vmatpush1.msra.mxu0 0.0
        %337 = vmatprep.mubr.f32.mxu0 0.0
        %338 = vmatmul.mubr.f32.gmra.mrb[0].mxu0 %v264
        %v339 = vpop.f32.mrb[0].mxu0
        %v340 = vadd.f32 0.0, %v339
        %v341 = vpop.f32.mrb[0].mxu0
        %342 = vmatprep.mubr.f32.mxu0 0.0
        %343 = vmatmul.mubr.f32.gmra.mrb[0].mxu0 %v265
        %v344 = vpop.f32.mrb[0].mxu0
        %v345 = vadd.f32 0.0, %v344
        %v346 = vpop.f32.mrb[0].mxu0
        %347 = vmatprep.mubr.f32.mxu0 0.0
        %348 = vmatmul.mubr.f32.gmra.mrb[0].mxu0 %v266
        %v349 = vpop.f32.mrb[0].mxu0
        %v350 = vadd.f32 0.0, %v349
        %v351 = vpop.f32.mrb[0].mxu0
        %352 = vmatprep.mubr.f32.mxu0 0.0
        %353 = vmatmul.mubr.f32.gmra.mrb[0].mxu0 %v267
        %v354 = vpop.f32.mrb[0].mxu0
        %v355 = vadd.f32 0.0, %v354
        %v356 = vpop.f32.mrb[0].mxu0
        %357 = vdwg.mxu0
        %v358 = vadd.f32 %v269, %v340
        %v359 = vadd.f32 %v270, %v345
        %v360 = vadd.f32 %v271, %v350
        %v361 = vadd.f32 %v272, %v355
        %s362 = scalar_lea.vmem %s1, 8
        %v363 = vld [vmem:[%s362] sm:$0xff]
        %v364 = vcombine.low %v358, %v360
        %v365 = vcombine.high %v358, %v360
        %v367 = vunpack.c.l.s4 1983009808
        %v368 = vunpack.c.0.s8 %v367
        %v369 = vlaneseq
        %v370 = vshrl.u32 %v369, 7
        %v371 = vsub.s32 %v368, %v370
        %v372 = vrot.slane %v364, %v371
        %v374 = vunpack.c.l.s4 1983009808
        %v375 = vunpack.c.0.s8 %v374
        %v376 = vlaneseq
        %v377 = vshrl.u32 %v376, 7
        %v378 = vsub.s32 %v375, %v377
        %v379 = vrot.slane %v365, %v378
        %v380 = vcombine.low %v359, %v361
        %v381 = vcombine.high %v359, %v361
        %v383 = vunpack.c.l.s4 1983009808
        %v384 = vunpack.c.0.s8 %v383
        %v385 = vlaneseq
        %v386 = vshrl.u32 %v385, 7
        %v387 = vsub.s32 %v384, %v386
        %v388 = vrot.slane %v380, %v387
        %v390 = vunpack.c.l.s4 1983009808
        %v391 = vunpack.c.0.s8 %v390
        %v392 = vlaneseq
        %v393 = vshrl.u32 %v392, 7
        %v394 = vsub.s32 %v391, %v393
        %v395 = vrot.slane %v381, %v394
        %v396 = vcombine.low %v372, %v388
        %v397 = vcombine.high %v372, %v388
        %v399 = vunpack.c.l.s4 1934713408
        %v400 = vunpack.c.0.s8 %v399
        %v401 = vlaneseq
        %v402 = vshrl.u32 %v401, 7
        %v403 = vsub.s32 %v400, %v402
        %v404 = vrot.slane %v396, %v403
        %v406 = vunpack.c.l.s4 1934713408
        %v407 = vunpack.c.0.s8 %v406
        %v408 = vlaneseq
        %v409 = vshrl.u32 %v408, 7
        %v410 = vsub.s32 %v407, %v409
        %v411 = vrot.slane %v397, %v410
        %v412 = vcombine.low %v379, %v395
        %v413 = vcombine.high %v379, %v395
        %v415 = vunpack.c.l.s4 1934713408
        %v416 = vunpack.c.0.s8 %v415
        %v417 = vlaneseq
        %v418 = vshrl.u32 %v417, 7
        %v419 = vsub.s32 %v416, %v418
        %v420 = vrot.slane %v412, %v419
        %v422 = vunpack.c.l.s4 1934713408
        %v423 = vunpack.c.0.s8 %v422
        %v424 = vlaneseq
        %v425 = vshrl.u32 %v424, 7
        %v426 = vsub.s32 %v423, %v425
        %v427 = vrot.slane %v413, %v426
        %v428 = vcombine.high %v404, 0.0
        %v429 = vcombine.high %v411, 0.0
        %v430 = vcombine.high %v420, 0.0
        %v431 = vcombine.high %v427, 0.0
        %v432 = vcombine.low 0.0, 0.0
        %v433 = vcombine.high 0.0, 0.0
        %v435 = vunpack.c.l.s4 1983009808
        %v436 = vunpack.c.0.s8 %v435
        %v437 = vlaneseq
        %v438 = vshrl.u32 %v437, 7
        %v439 = vsub.s32 %v436, %v438
        %v440 = vrot.slane %v432, %v439
        %v442 = vunpack.c.l.s4 1983009808
        %v443 = vunpack.c.0.s8 %v442
        %v444 = vlaneseq
        %v445 = vshrl.u32 %v444, 7
        %v446 = vsub.s32 %v443, %v445
        %v447 = vrot.slane %v433, %v446
        %v448 = vcombine.low %v440, %v440
        %v449 = vcombine.high %v440, %v440
        %v451 = vunpack.c.l.s4 1934713408
        %v452 = vunpack.c.0.s8 %v451
        %v453 = vlaneseq
        %v454 = vshrl.u32 %v453, 7
        %v455 = vsub.s32 %v452, %v454
        %v456 = vrot.slane %v448, %v455
        %v458 = vunpack.c.l.s4 1934713408
        %v459 = vunpack.c.0.s8 %v458
        %v460 = vlaneseq
        %v461 = vshrl.u32 %v460, 7
        %v462 = vsub.s32 %v459, %v461
        %v463 = vrot.slane %v449, %v462
        %v464 = vcombine.low %v447, %v447
        %v465 = vcombine.high %v447, %v447
        %v467 = vunpack.c.l.s4 1934713408
        %v468 = vunpack.c.0.s8 %v467
        %v469 = vlaneseq
        %v470 = vshrl.u32 %v469, 7
        %v471 = vsub.s32 %v468, %v470
        %v472 = vrot.slane %v464, %v471
        %v474 = vunpack.c.l.s4 1934713408
        %v475 = vunpack.c.0.s8 %v474
        %v476 = vlaneseq
        %v477 = vshrl.u32 %v476, 7
        %v478 = vsub.s32 %v475, %v477
        %v479 = vrot.slane %v465, %v478
        %v480 = vcombine.low %v456, %v456
        %v481 = vcombine.high %v456, %v456
        %v482 = vcombine.low %v463, %v463
        %v483 = vcombine.high %v463, %v463
        %v484 = vcombine.low %v472, %v472
        %v485 = vcombine.high %v472, %v472
        %v486 = vcombine.low %v479, %v479
        %v487 = vcombine.high %v479, %v479
        %vm488 = vcmask 31744
        %v490 = vsel %vm488, %v363, 0
        %vm492 = vcmask 1043456
        %v494 = vsel %vm492, %v404, 0
        %v497 = vsel %vm492, %v428, 0
        %v500 = vsel %vm492, %v411, 0
        %v503 = vsel %vm492, %v429, 0
        %v506 = vsel %vm492, %v420, 0
        %v509 = vsel %vm492, %v430, 0
        %v512 = vsel %vm492, %v427, 0
        %v515 = vsel %vm492, %v431, 0
        %517 = vmatprep.subr.mxu0 %v497
        %518 = vmatpush1.msra.mxu0 %v494
        %519 = vmatprep.subr.mxu0 0.0
        %520 = vmatpush1.msra.mxu0 0.0
        %521 = vmatprep.subr.mxu0 0.0
        %522 = vmatpush1.msra.mxu0 0.0
        %523 = vmatprep.subr.mxu0 0.0
        %524 = vmatpush1.msra.mxu0 0.0
        %525 = vmatprep.subr.mxu0 0.0
        %526 = vmatpush1.msra.mxu0 0.0
        %527 = vmatprep.subr.mxu0 0.0
        %528 = vmatpush1.msra.mxu0 0.0
        %529 = vmatprep.subr.mxu0 0.0
        %530 = vmatpush1.msra.mxu0 0.0
        %531 = vmatprep.subr.mxu0 0.0
        %532 = vmatpush1.msra.mxu0 0.0
        %533 = vmatprep.subr.mxu0 0.0
        %534 = vmatpush1.msra.mxu0 0.0
        %535 = vmatprep.subr.mxu0 0.0
        %536 = vmatpush1.msra.mxu0 0.0
        %537 = vmatprep.subr.mxu0 0.0
        %538 = vmatpush1.msra.mxu0 0.0
        %539 = vmatprep.subr.mxu0 0.0
        %540 = vmatpush1.msra.mxu0 0.0
        %541 = vmatprep.subr.mxu0 0.0
        %542 = vmatpush1.msra.mxu0 0.0
        %543 = vmatprep.subr.mxu0 0.0
        %544 = vmatpush1.msra.mxu0 0.0
        %545 = vmatprep.subr.mxu0 0.0
        %546 = vmatpush1.msra.mxu0 0.0
        %547 = vmatprep.subr.mxu0 0.0
        %548 = vmatpush1.msra.mxu0 0.0
        %549 = vmatprep.subr.mxu0 0.0
        %550 = vmatpush1.msra.mxu0 0.0
        %551 = vmatprep.subr.mxu0 0.0
        %552 = vmatpush1.msra.mxu0 0.0
        %553 = vmatprep.subr.mxu0 0.0
        %554 = vmatpush1.msra.mxu0 0.0
        %555 = vmatprep.subr.mxu0 0.0
        %556 = vmatpush1.msra.mxu0 0.0
        %557 = vmatprep.subr.mxu0 0.0
        %558 = vmatpush1.msra.mxu0 0.0
        %559 = vmatprep.subr.mxu0 0.0
        %560 = vmatpush1.msra.mxu0 0.0
        %561 = vmatprep.subr.mxu0 0.0
        %562 = vmatpush1.msra.mxu0 0.0
        %563 = vmatprep.subr.mxu0 0.0
        %564 = vmatpush1.msra.mxu0 0.0
        %565 = vmatprep.subr.mxu0 0.0
        %566 = vmatpush1.msra.mxu0 0.0
        %567 = vmatprep.subr.mxu0 0.0
        %568 = vmatpush1.msra.mxu0 0.0
        %569 = vmatprep.subr.mxu0 0.0
        %570 = vmatpush1.msra.mxu0 0.0
        %571 = vmatprep.subr.mxu0 0.0
        %572 = vmatpush1.msra.mxu0 0.0
        %573 = vmatprep.subr.mxu0 0.0
        %574 = vmatpush1.msra.mxu0 0.0
        %575 = vmatprep.subr.mxu0 0.0
        %576 = vmatpush1.msra.mxu0 0.0
        %577 = vmatprep.subr.mxu0 0.0
        %578 = vmatpush1.msra.mxu0 0.0
        %579 = vmatprep.subr.mxu0 0.0
        %580 = vmatpush1.msra.mxu0 0.0
        %581 = vmatprep.mubr.f32.mxu0 0.0
        %582 = vmatmul.mubr.f32.gmra.mrb[0].mxu0 %v490
        %v583 = vpop.f32.mrb[0].mxu0
        %v584 = vadd.f32 %v480, %v583
        %v585 = vpop.f32.mrb[0].mxu0
        %v586 = vadd.f32 %v481, %v585
        %587 = vdwg.mxu0
        %588 = vmatprep.subr.mxu0 %v503
        %589 = vmatpush1.msra.mxu0 %v500
        %590 = vmatprep.subr.mxu0 0.0
        %591 = vmatpush1.msra.mxu0 0.0
        %592 = vmatprep.subr.mxu0 0.0
        %593 = vmatpush1.msra.mxu0 0.0
        %594 = vmatprep.subr.mxu0 0.0
        %595 = vmatpush1.msra.mxu0 0.0
        %596 = vmatprep.subr.mxu0 0.0
        %597 = vmatpush1.msra.mxu0 0.0
        %598 = vmatprep.subr.mxu0 0.0
        %599 = vmatpush1.msra.mxu0 0.0
        %600 = vmatprep.subr.mxu0 0.0
        %601 = vmatpush1.msra.mxu0 0.0
        %602 = vmatprep.subr.mxu0 0.0
        %603 = vmatpush1.msra.mxu0 0.0
        %604 = vmatprep.subr.mxu0 0.0
        %605 = vmatpush1.msra.mxu0 0.0
        %606 = vmatprep.subr.mxu0 0.0
        %607 = vmatpush1.msra.mxu0 0.0
        %608 = vmatprep.subr.mxu0 0.0
        %609 = vmatpush1.msra.mxu0 0.0
        %610 = vmatprep.subr.mxu0 0.0
        %611 = vmatpush1.msra.mxu0 0.0
        %612 = vmatprep.subr.mxu0 0.0
        %613 = vmatpush1.msra.mxu0 0.0
        %614 = vmatprep.subr.mxu0 0.0
        %615 = vmatpush1.msra.mxu0 0.0
        %616 = vmatprep.subr.mxu0 0.0
        %617 = vmatpush1.msra.mxu0 0.0
        %618 = vmatprep.subr.mxu0 0.0
        %619 = vmatpush1.msra.mxu0 0.0
        %620 = vmatprep.subr.mxu0 0.0
        %621 = vmatpush1.msra.mxu0 0.0
        %622 = vmatprep.subr.mxu0 0.0
        %623 = vmatpush1.msra.mxu0 0.0
        %624 = vmatprep.subr.mxu0 0.0
        %625 = vmatpush1.msra.mxu0 0.0
        %626 = vmatprep.subr.mxu0 0.0
        %627 = vmatpush1.msra.mxu0 0.0
        %628 = vmatprep.subr.mxu0 0.0
        %629 = vmatpush1.msra.mxu0 0.0
        %630 = vmatprep.subr.mxu0 0.0
        %631 = vmatpush1.msra.mxu0 0.0
        %632 = vmatprep.subr.mxu0 0.0
        %633 = vmatpush1.msra.mxu0 0.0
        %634 = vmatprep.subr.mxu0 0.0
        %635 = vmatpush1.msra.mxu0 0.0
        %636 = vmatprep.subr.mxu0 0.0
        %637 = vmatpush1.msra.mxu0 0.0
        %638 = vmatprep.subr.mxu0 0.0
        %639 = vmatpush1.msra.mxu0 0.0
        %640 = vmatprep.subr.mxu0 0.0
        %641 = vmatpush1.msra.mxu0 0.0
        %642 = vmatprep.subr.mxu0 0.0
        %643 = vmatpush1.msra.mxu0 0.0
        %644 = vmatprep.subr.mxu0 0.0
        %645 = vmatpush1.msra.mxu0 0.0
        %646 = vmatprep.subr.mxu0 0.0
        %647 = vmatpush1.msra.mxu0 0.0
        %648 = vmatprep.subr.mxu0 0.0
        %649 = vmatpush1.msra.mxu0 0.0
        %650 = vmatprep.subr.mxu0 0.0
        %651 = vmatpush1.msra.mxu0 0.0
        %652 = vmatprep.mubr.f32.mxu0 0.0
        %653 = vmatmul.mubr.f32.gmra.mrb[0].mxu0 %v490
        %v654 = vpop.f32.mrb[0].mxu0
        %v655 = vadd.f32 %v482, %v654
        %v656 = vpop.f32.mrb[0].mxu0
        %v657 = vadd.f32 %v483, %v656
        %658 = vdwg.mxu0
        %659 = vmatprep.subr.mxu0 %v509
        %660 = vmatpush1.msra.mxu0 %v506
        %661 = vmatprep.subr.mxu0 0.0
        %662 = vmatpush1.msra.mxu0 0.0
        %663 = vmatprep.subr.mxu0 0.0
        %664 = vmatpush1.msra.mxu0 0.0
        %665 = vmatprep.subr.mxu0 0.0
        %666 = vmatpush1.msra.mxu0 0.0
        %667 = vmatprep.subr.mxu0 0.0
        %668 = vmatpush1.msra.mxu0 0.0
        %669 = vmatprep.subr.mxu0 0.0
        %670 = vmatpush1.msra.mxu0 0.0
        %671 = vmatprep.subr.mxu0 0.0
        %672 = vmatpush1.msra.mxu0 0.0
        %673 = vmatprep.subr.mxu0 0.0
        %674 = vmatpush1.msra.mxu0 0.0
        %675 = vmatprep.subr.mxu0 0.0
        %676 = vmatpush1.msra.mxu0 0.0
        %677 = vmatprep.subr.mxu0 0.0
        %678 = vmatpush1.msra.mxu0 0.0
        %679 = vmatprep.subr.mxu0 0.0
        %680 = vmatpush1.msra.mxu0 0.0
        %681 = vmatprep.subr.mxu0 0.0
        %682 = vmatpush1.msra.mxu0 0.0
        %683 = vmatprep.subr.mxu0 0.0
        %684 = vmatpush1.msra.mxu0 0.0
        %685 = vmatprep.subr.mxu0 0.0
        %686 = vmatpush1.msra.mxu0 0.0
        %687 = vmatprep.subr.mxu0 0.0
        %688 = vmatpush1.msra.mxu0 0.0
        %689 = vmatprep.subr.mxu0 0.0
        %690 = vmatpush1.msra.mxu0 0.0
        %691 = vmatprep.subr.mxu0 0.0
        %692 = vmatpush1.msra.mxu0 0.0
        %693 = vmatprep.subr.mxu0 0.0
        %694 = vmatpush1.msra.mxu0 0.0
        %695 = vmatprep.subr.mxu0 0.0
        %696 = vmatpush1.msra.mxu0 0.0
        %697 = vmatprep.subr.mxu0 0.0
        %698 = vmatpush1.msra.mxu0 0.0
        %699 = vmatprep.subr.mxu0 0.0
        %700 = vmatpush1.msra.mxu0 0.0
        %701 = vmatprep.subr.mxu0 0.0
        %702 = vmatpush1.msra.mxu0 0.0
        %703 = vmatprep.subr.mxu0 0.0
        %704 = vmatpush1.msra.mxu0 0.0
        %705 = vmatprep.subr.mxu0 0.0
        %706 = vmatpush1.msra.mxu0 0.0
        %707 = vmatprep.subr.mxu0 0.0
        %708 = vmatpush1.msra.mxu0 0.0
        %709 = vmatprep.subr.mxu0 0.0
        %710 = vmatpush1.msra.mxu0 0.0
        %711 = vmatprep.subr.mxu0 0.0
        %712 = vmatpush1.msra.mxu0 0.0
        %713 = vmatprep.subr.mxu0 0.0
        %714 = vmatpush1.msra.mxu0 0.0
        %715 = vmatprep.subr.mxu0 0.0
        %716 = vmatpush1.msra.mxu0 0.0
        %717 = vmatprep.subr.mxu0 0.0
        %718 = vmatpush1.msra.mxu0 0.0
        %719 = vmatprep.subr.mxu0 0.0
        %720 = vmatpush1.msra.mxu0 0.0
        %721 = vmatprep.subr.mxu0 0.0
        %722 = vmatpush1.msra.mxu0 0.0
        %723 = vmatprep.mubr.f32.mxu0 0.0
        %724 = vmatmul.mubr.f32.gmra.mrb[0].mxu0 %v490
        %v725 = vpop.f32.mrb[0].mxu0
        %v726 = vadd.f32 %v484, %v725
        %v727 = vpop.f32.mrb[0].mxu0
        %v728 = vadd.f32 %v485, %v727
        %729 = vdwg.mxu0
        %730 = vmatprep.subr.mxu0 %v515
        %731 = vmatpush1.msra.mxu0 %v512
        %732 = vmatprep.subr.mxu0 0.0
        %733 = vmatpush1.msra.mxu0 0.0
        %734 = vmatprep.subr.mxu0 0.0
        %735 = vmatpush1.msra.mxu0 0.0
        %736 = vmatprep.subr.mxu0 0.0
        %737 = vmatpush1.msra.mxu0 0.0
        %738 = vmatprep.subr.mxu0 0.0
        %739 = vmatpush1.msra.mxu0 0.0
        %740 = vmatprep.subr.mxu0 0.0
        %741 = vmatpush1.msra.mxu0 0.0
        %742 = vmatprep.subr.mxu0 0.0
        %743 = vmatpush1.msra.mxu0 0.0
        %744 = vmatprep.subr.mxu0 0.0
        %745 = vmatpush1.msra.mxu0 0.0
        %746 = vmatprep.subr.mxu0 0.0
        %747 = vmatpush1.msra.mxu0 0.0
        %748 = vmatprep.subr.mxu0 0.0
        %749 = vmatpush1.msra.mxu0 0.0
        %750 = vmatprep.subr.mxu0 0.0
        %751 = vmatpush1.msra.mxu0 0.0
        %752 = vmatprep.subr.mxu0 0.0
        %753 = vmatpush1.msra.mxu0 0.0
        %754 = vmatprep.subr.mxu0 0.0
        %755 = vmatpush1.msra.mxu0 0.0
        %756 = vmatprep.subr.mxu0 0.0
        %757 = vmatpush1.msra.mxu0 0.0
        %758 = vmatprep.subr.mxu0 0.0
        %759 = vmatpush1.msra.mxu0 0.0
        %760 = vmatprep.subr.mxu0 0.0
        %761 = vmatpush1.msra.mxu0 0.0
        %762 = vmatprep.subr.mxu0 0.0
        %763 = vmatpush1.msra.mxu0 0.0
        %764 = vmatprep.subr.mxu0 0.0
        %765 = vmatpush1.msra.mxu0 0.0
        %766 = vmatprep.subr.mxu0 0.0
        %767 = vmatpush1.msra.mxu0 0.0
        %768 = vmatprep.subr.mxu0 0.0
        %769 = vmatpush1.msra.mxu0 0.0
        %770 = vmatprep.subr.mxu0 0.0
        %771 = vmatpush1.msra.mxu0 0.0
        %772 = vmatprep.subr.mxu0 0.0
        %773 = vmatpush1.msra.mxu0 0.0
        %774 = vmatprep.subr.mxu0 0.0
        %775 = vmatpush1.msra.mxu0 0.0
        %776 = vmatprep.subr.mxu0 0.0
        %777 = vmatpush1.msra.mxu0 0.0
        %778 = vmatprep.subr.mxu0 0.0
        %779 = vmatpush1.msra.mxu0 0.0
        %780 = vmatprep.subr.mxu0 0.0
        %781 = vmatpush1.msra.mxu0 0.0
        %782 = vmatprep.subr.mxu0 0.0
        %783 = vmatpush1.msra.mxu0 0.0
        %784 = vmatprep.subr.mxu0 0.0
        %785 = vmatpush1.msra.mxu0 0.0
        %786 = vmatprep.subr.mxu0 0.0
        %787 = vmatpush1.msra.mxu0 0.0
        %788 = vmatprep.subr.mxu0 0.0
        %789 = vmatpush1.msra.mxu0 0.0
        %790 = vmatprep.subr.mxu0 0.0
        %791 = vmatpush1.msra.mxu0 0.0
        %792 = vmatprep.subr.mxu0 0.0
        %793 = vmatpush1.msra.mxu0 0.0
        %794 = vmatprep.mubr.f32.mxu0 0.0
        %795 = vmatmul.mubr.f32.gmra.mrb[0].mxu0 %v490
        %v796 = vpop.f32.mrb[0].mxu0
        %v797 = vadd.f32 %v486, %v796
        %v798 = vpop.f32.mrb[0].mxu0
        %v799 = vadd.f32 %v487, %v798
        %800 = vdwg.mxu0
        %v801 = vcombine.low %v584, %v655
        %v802 = vcombine.high %v584, %v655
        %v804 = vunpack.c.l.s4 1983009808
        %v805 = vunpack.c.0.s8 %v804
        %v806 = vlaneseq
        %v807 = vshrl.u32 %v806, 7
        %v808 = vsub.s32 %v805, %v807
        %v809 = vrot.slane %v801, %v808
        %v811 = vunpack.c.l.s4 1983009808
        %v812 = vunpack.c.0.s8 %v811
        %v813 = vlaneseq
        %v814 = vshrl.u32 %v813, 7
        %v815 = vsub.s32 %v812, %v814
        %v816 = vrot.slane %v802, %v815
        %v817 = vcombine.low %v586, %v657
        %v818 = vcombine.high %v586, %v657
        %v820 = vunpack.c.l.s4 1983009808
        %v821 = vunpack.c.0.s8 %v820
        %v822 = vlaneseq
        %v823 = vshrl.u32 %v822, 7
        %v824 = vsub.s32 %v821, %v823
        %v825 = vrot.slane %v817, %v824
        %v827 = vunpack.c.l.s4 1983009808
        %v828 = vunpack.c.0.s8 %v827
        %v829 = vlaneseq
        %v830 = vshrl.u32 %v829, 7
        %v831 = vsub.s32 %v828, %v830
        %v832 = vrot.slane %v818, %v831
        %v833 = vcombine.low %v726, %v797
        %v834 = vcombine.high %v726, %v797
        %v836 = vunpack.c.l.s4 1983009808
        %v837 = vunpack.c.0.s8 %v836
        %v838 = vlaneseq
        %v839 = vshrl.u32 %v838, 7
        %v840 = vsub.s32 %v837, %v839
        %v841 = vrot.slane %v833, %v840
        %v843 = vunpack.c.l.s4 1983009808
        %v844 = vunpack.c.0.s8 %v843
        %v845 = vlaneseq
        %v846 = vshrl.u32 %v845, 7
        %v847 = vsub.s32 %v844, %v846
        %v848 = vrot.slane %v834, %v847
        %v849 = vcombine.low %v728, %v799
        %v850 = vcombine.high %v728, %v799
        %v852 = vunpack.c.l.s4 1983009808
        %v853 = vunpack.c.0.s8 %v852
        %v854 = vlaneseq
        %v855 = vshrl.u32 %v854, 7
        %v856 = vsub.s32 %v853, %v855
        %v857 = vrot.slane %v849, %v856
        %v859 = vunpack.c.l.s4 1983009808
        %v860 = vunpack.c.0.s8 %v859
        %v861 = vlaneseq
        %v862 = vshrl.u32 %v861, 7
        %v863 = vsub.s32 %v860, %v862
        %v864 = vrot.slane %v850, %v863
        %v865 = vcombine.low %v809, %v825
        %v866 = vcombine.high %v809, %v825
        %v868 = vunpack.c.l.s4 1934713408
        %v869 = vunpack.c.0.s8 %v868
        %v870 = vlaneseq
        %v871 = vshrl.u32 %v870, 7
        %v872 = vsub.s32 %v869, %v871
        %v873 = vrot.slane %v865, %v872
        %v875 = vunpack.c.l.s4 1934713408
        %v876 = vunpack.c.0.s8 %v875
        %v877 = vlaneseq
        %v878 = vshrl.u32 %v877, 7
        %v879 = vsub.s32 %v876, %v878
        %v880 = vrot.slane %v866, %v879
        %v881 = vcombine.low %v816, %v832
        %v882 = vcombine.high %v816, %v832
        %v884 = vunpack.c.l.s4 1934713408
        %v885 = vunpack.c.0.s8 %v884
        %v886 = vlaneseq
        %v887 = vshrl.u32 %v886, 7
        %v888 = vsub.s32 %v885, %v887
        %v889 = vrot.slane %v881, %v888
        %v891 = vunpack.c.l.s4 1934713408
        %v892 = vunpack.c.0.s8 %v891
        %v893 = vlaneseq
        %v894 = vshrl.u32 %v893, 7
        %v895 = vsub.s32 %v892, %v894
        %v896 = vrot.slane %v882, %v895
        %v897 = vcombine.low %v841, %v857
        %v898 = vcombine.high %v841, %v857
        %v900 = vunpack.c.l.s4 1934713408
        %v901 = vunpack.c.0.s8 %v900
        %v902 = vlaneseq
        %v903 = vshrl.u32 %v902, 7
        %v904 = vsub.s32 %v901, %v903
        %v905 = vrot.slane %v897, %v904
        %v907 = vunpack.c.l.s4 1934713408
        %v908 = vunpack.c.0.s8 %v907
        %v909 = vlaneseq
        %v910 = vshrl.u32 %v909, 7
        %v911 = vsub.s32 %v908, %v910
        %v912 = vrot.slane %v898, %v911
        %v913 = vcombine.low %v848, %v864
        %v914 = vcombine.high %v848, %v864
        %v916 = vunpack.c.l.s4 1934713408
        %v917 = vunpack.c.0.s8 %v916
        %v918 = vlaneseq
        %v919 = vshrl.u32 %v918, 7
        %v920 = vsub.s32 %v917, %v919
        %v921 = vrot.slane %v913, %v920
        %v923 = vunpack.c.l.s4 1934713408
        %v924 = vunpack.c.0.s8 %v923
        %v925 = vlaneseq
        %v926 = vshrl.u32 %v925, 7
        %v927 = vsub.s32 %v924, %v926
        %v928 = vrot.slane %v914, %v927
        %v929 = vcombine.low %v873, %v905
        %v930 = vcombine.high %v873, %v905
        %v931 = vcombine.low %v880, %v912
        %v932 = vcombine.high %v880, %v912
        %v933 = vcombine.low %v889, %v921
        %v934 = vcombine.high %v889, %v921
        %v935 = vcombine.low %v896, %v928
        %v936 = vcombine.high %v896, %v928
        %v937 = vcombine.low %v264, %v266
        %v938 = vcombine.high %v264, %v266
        %v940 = vunpack.c.l.s4 1983009808
        %v941 = vunpack.c.0.s8 %v940
        %v942 = vlaneseq
        %v943 = vshrl.u32 %v942, 7
        %v944 = vsub.s32 %v941, %v943
        %v945 = vrot.slane %v937, %v944
        %v947 = vunpack.c.l.s4 1983009808
        %v948 = vunpack.c.0.s8 %v947
        %v949 = vlaneseq
        %v950 = vshrl.u32 %v949, 7
        %v951 = vsub.s32 %v948, %v950
        %v952 = vrot.slane %v938, %v951
        %v953 = vcombine.low %v265, %v267
        %v954 = vcombine.high %v265, %v267
        %v956 = vunpack.c.l.s4 1983009808
        %v957 = vunpack.c.0.s8 %v956
        %v958 = vlaneseq
        %v959 = vshrl.u32 %v958, 7
        %v960 = vsub.s32 %v957, %v959
        %v961 = vrot.slane %v953, %v960
        %v963 = vunpack.c.l.s4 1983009808
        %v964 = vunpack.c.0.s8 %v963
        %v965 = vlaneseq
        %v966 = vshrl.u32 %v965, 7
        %v967 = vsub.s32 %v964, %v966
        %v968 = vrot.slane %v954, %v967
        %v969 = vcombine.low %v945, %v961
        %v970 = vcombine.high %v945, %v961
        %v972 = vunpack.c.l.s4 1934713408
        %v973 = vunpack.c.0.s8 %v972
        %v974 = vlaneseq
        %v975 = vshrl.u32 %v974, 7
        %v976 = vsub.s32 %v973, %v975
        %v977 = vrot.slane %v969, %v976
        %v979 = vunpack.c.l.s4 1934713408
        %v980 = vunpack.c.0.s8 %v979
        %v981 = vlaneseq
        %v982 = vshrl.u32 %v981, 7
        %v983 = vsub.s32 %v980, %v982
        %v984 = vrot.slane %v970, %v983
        %v985 = vcombine.low %v952, %v968
        %v986 = vcombine.high %v952, %v968
        %v988 = vunpack.c.l.s4 1934713408
        %v989 = vunpack.c.0.s8 %v988
        %v990 = vlaneseq
        %v991 = vshrl.u32 %v990, 7
        %v992 = vsub.s32 %v989, %v991
        %v993 = vrot.slane %v985, %v992
        %v995 = vunpack.c.l.s4 1934713408
        %v996 = vunpack.c.0.s8 %v995
        %v997 = vlaneseq
        %v998 = vshrl.u32 %v997, 7
        %v999 = vsub.s32 %v996, %v998
        %v1000 = vrot.slane %v986, %v999
        %v1001 = vcombine.high %v977, 0.0
        %v1002 = vcombine.high %v984, 0.0
        %v1003 = vcombine.high %v993, 0.0
        %v1004 = vcombine.high %v1000, 0.0
        %v1005 = vcombine.low %v929, %v931
        %v1006 = vcombine.high %v929, %v931
        %v1008 = vunpack.c.l.s4 1983009808
        %v1009 = vunpack.c.0.s8 %v1008
        %v1010 = vlaneseq
        %v1011 = vshrl.u32 %v1010, 7
        %v1012 = vsub.s32 %v1009, %v1011
        %v1013 = vrot.slane %v1005, %v1012
        %v1015 = vunpack.c.l.s4 1983009808
        %v1016 = vunpack.c.0.s8 %v1015
        %v1017 = vlaneseq
        %v1018 = vshrl.u32 %v1017, 7
        %v1019 = vsub.s32 %v1016, %v1018
        %v1020 = vrot.slane %v1006, %v1019
        %v1021 = vcombine.low %v930, %v932
        %v1022 = vcombine.high %v930, %v932
        %v1024 = vunpack.c.l.s4 1983009808
        %v1025 = vunpack.c.0.s8 %v1024
        %v1026 = vlaneseq
        %v1027 = vshrl.u32 %v1026, 7
        %v1028 = vsub.s32 %v1025, %v1027
        %v1029 = vrot.slane %v1021, %v1028
        %v1031 = vunpack.c.l.s4 1983009808
        %v1032 = vunpack.c.0.s8 %v1031
        %v1033 = vlaneseq
        %v1034 = vshrl.u32 %v1033, 7
        %v1035 = vsub.s32 %v1032, %v1034
        %v1036 = vrot.slane %v1022, %v1035
        %v1037 = vcombine.low %v933, %v935
        %v1038 = vcombine.high %v933, %v935
        %v1040 = vunpack.c.l.s4 1983009808
        %v1041 = vunpack.c.0.s8 %v1040
        %v1042 = vlaneseq
        %v1043 = vshrl.u32 %v1042, 7
        %v1044 = vsub.s32 %v1041, %v1043
        %v1045 = vrot.slane %v1037, %v1044
        %v1047 = vunpack.c.l.s4 1983009808
        %v1048 = vunpack.c.0.s8 %v1047
        %v1049 = vlaneseq
        %v1050 = vshrl.u32 %v1049, 7
        %v1051 = vsub.s32 %v1048, %v1050
        %v1052 = vrot.slane %v1038, %v1051
        %v1053 = vcombine.low %v934, %v936
        %v1054 = vcombine.high %v934, %v936
        %v1056 = vunpack.c.l.s4 1983009808
        %v1057 = vunpack.c.0.s8 %v1056
        %v1058 = vlaneseq
        %v1059 = vshrl.u32 %v1058, 7
        %v1060 = vsub.s32 %v1057, %v1059
        %v1061 = vrot.slane %v1053, %v1060
        %v1063 = vunpack.c.l.s4 1983009808
        %v1064 = vunpack.c.0.s8 %v1063
        %v1065 = vlaneseq
        %v1066 = vshrl.u32 %v1065, 7
        %v1067 = vsub.s32 %v1064, %v1066
        %v1068 = vrot.slane %v1054, %v1067
        %v1069 = vcombine.low %v1013, %v1029
        %v1070 = vcombine.high %v1013, %v1029
        %v1072 = vunpack.c.l.s4 1934713408
        %v1073 = vunpack.c.0.s8 %v1072
        %v1074 = vlaneseq
        %v1075 = vshrl.u32 %v1074, 7
        %v1076 = vsub.s32 %v1073, %v1075
        %v1077 = vrot.slane %v1069, %v1076
        %v1079 = vunpack.c.l.s4 1934713408
        %v1080 = vunpack.c.0.s8 %v1079
        %v1081 = vlaneseq
        %v1082 = vshrl.u32 %v1081, 7
        %v1083 = vsub.s32 %v1080, %v1082
        %v1084 = vrot.slane %v1070, %v1083
        %v1085 = vcombine.low %v1020, %v1036
        %v1086 = vcombine.high %v1020, %v1036
        %v1088 = vunpack.c.l.s4 1934713408
        %v1089 = vunpack.c.0.s8 %v1088
        %v1090 = vlaneseq
        %v1091 = vshrl.u32 %v1090, 7
        %v1092 = vsub.s32 %v1089, %v1091
        %v1093 = vrot.slane %v1085, %v1092
        %v1095 = vunpack.c.l.s4 1934713408
        %v1096 = vunpack.c.0.s8 %v1095
        %v1097 = vlaneseq
        %v1098 = vshrl.u32 %v1097, 7
        %v1099 = vsub.s32 %v1096, %v1098
        %v1100 = vrot.slane %v1086, %v1099
        %v1101 = vcombine.low %v1045, %v1061
        %v1102 = vcombine.high %v1045, %v1061
        %v1104 = vunpack.c.l.s4 1934713408
        %v1105 = vunpack.c.0.s8 %v1104
        %v1106 = vlaneseq
        %v1107 = vshrl.u32 %v1106, 7
        %v1108 = vsub.s32 %v1105, %v1107
        %v1109 = vrot.slane %v1101, %v1108
        %v1111 = vunpack.c.l.s4 1934713408
        %v1112 = vunpack.c.0.s8 %v1111
        %v1113 = vlaneseq
        %v1114 = vshrl.u32 %v1113, 7
        %v1115 = vsub.s32 %v1112, %v1114
        %v1116 = vrot.slane %v1102, %v1115
        %v1117 = vcombine.low %v1052, %v1068
        %v1118 = vcombine.high %v1052, %v1068
        %v1120 = vunpack.c.l.s4 1934713408
        %v1121 = vunpack.c.0.s8 %v1120
        %v1122 = vlaneseq
        %v1123 = vshrl.u32 %v1122, 7
        %v1124 = vsub.s32 %v1121, %v1123
        %v1125 = vrot.slane %v1117, %v1124
        %v1127 = vunpack.c.l.s4 1934713408
        %v1128 = vunpack.c.0.s8 %v1127
        %v1129 = vlaneseq
        %v1130 = vshrl.u32 %v1129, 7
        %v1131 = vsub.s32 %v1128, %v1130
        %v1132 = vrot.slane %v1118, %v1131
        %v1133 = vcombine.low %v1077, %v1109
        %v1134 = vcombine.high %v1077, %v1109
        %v1135 = vcombine.low %v1084, %v1116
        %v1136 = vcombine.high %v1084, %v1116
        %v1137 = vcombine.low %v1093, %v1125
        %v1138 = vcombine.high %v1093, %v1125
        %v1139 = vcombine.low %v1100, %v1132
        %v1140 = vcombine.high %v1100, %v1132
        %v1142 = vsel %vm488, %v268, 0
        %v1145 = vsel %vm492, %v977, 0
        %v1148 = vsel %vm492, %v1001, 0
        %v1151 = vsel %vm492, %v984, 0
        %v1154 = vsel %vm492, %v1002, 0
        %v1157 = vsel %vm492, %v993, 0
        %v1160 = vsel %vm492, %v1003, 0
        %v1163 = vsel %vm492, %v1000, 0
        %v1166 = vsel %vm492, %v1004, 0
        %1168 = vmatprep.subr.mxu0 %v1148
        %1169 = vmatpush1.msra.mxu0 %v1145
        %1170 = vmatprep.subr.mxu0 0.0
        %1171 = vmatpush1.msra.mxu0 0.0
        %1172 = vmatprep.subr.mxu0 0.0
        %1173 = vmatpush1.msra.mxu0 0.0
        %1174 = vmatprep.subr.mxu0 0.0
        %1175 = vmatpush1.msra.mxu0 0.0
        %1176 = vmatprep.subr.mxu0 0.0
        %1177 = vmatpush1.msra.mxu0 0.0
        %1178 = vmatprep.subr.mxu0 0.0
        %1179 = vmatpush1.msra.mxu0 0.0
        %1180 = vmatprep.subr.mxu0 0.0
        %1181 = vmatpush1.msra.mxu0 0.0
        %1182 = vmatprep.subr.mxu0 0.0
        %1183 = vmatpush1.msra.mxu0 0.0
        %1184 = vmatprep.subr.mxu0 0.0
        %1185 = vmatpush1.msra.mxu0 0.0
        %1186 = vmatprep.subr.mxu0 0.0
        %1187 = vmatpush1.msra.mxu0 0.0
        %1188 = vmatprep.subr.mxu0 0.0
        %1189 = vmatpush1.msra.mxu0 0.0
        %1190 = vmatprep.subr.mxu0 0.0
        %1191 = vmatpush1.msra.mxu0 0.0
        %1192 = vmatprep.subr.mxu0 0.0
        %1193 = vmatpush1.msra.mxu0 0.0
        %1194 = vmatprep.subr.mxu0 0.0
        %1195 = vmatpush1.msra.mxu0 0.0
        %1196 = vmatprep.subr.mxu0 0.0
        %1197 = vmatpush1.msra.mxu0 0.0
        %1198 = vmatprep.subr.mxu0 0.0
        %1199 = vmatpush1.msra.mxu0 0.0
        %1200 = vmatprep.subr.mxu0 0.0
        %1201 = vmatpush1.msra.mxu0 0.0
        %1202 = vmatprep.subr.mxu0 0.0
        %1203 = vmatpush1.msra.mxu0 0.0
        %1204 = vmatprep.subr.mxu0 0.0
        %1205 = vmatpush1.msra.mxu0 0.0
        %1206 = vmatprep.subr.mxu0 0.0
        %1207 = vmatpush1.msra.mxu0 0.0
        %1208 = vmatprep.subr.mxu0 0.0
        %1209 = vmatpush1.msra.mxu0 0.0
        %1210 = vmatprep.subr.mxu0 0.0
        %1211 = vmatpush1.msra.mxu0 0.0
        %1212 = vmatprep.subr.mxu0 0.0
        %1213 = vmatpush1.msra.mxu0 0.0
        %1214 = vmatprep.subr.mxu0 0.0
        %1215 = vmatpush1.msra.mxu0 0.0
        %1216 = vmatprep.subr.mxu0 0.0
        %1217 = vmatpush1.msra.mxu0 0.0
        %1218 = vmatprep.subr.mxu0 0.0
        %1219 = vmatpush1.msra.mxu0 0.0
        %1220 = vmatprep.subr.mxu0 0.0
        %1221 = vmatpush1.msra.mxu0 0.0
        %1222 = vmatprep.subr.mxu0 0.0
        %1223 = vmatpush1.msra.mxu0 0.0
        %1224 = vmatprep.subr.mxu0 0.0
        %1225 = vmatpush1.msra.mxu0 0.0
        %1226 = vmatprep.subr.mxu0 0.0
        %1227 = vmatpush1.msra.mxu0 0.0
        %1228 = vmatprep.subr.mxu0 0.0
        %1229 = vmatpush1.msra.mxu0 0.0
        %1230 = vmatprep.subr.mxu0 0.0
        %1231 = vmatpush1.msra.mxu0 0.0
        %1232 = vmatprep.mubr.f32.mxu0 0.0
        %1233 = vmatmul.mubr.f32.gmra.mrb[0].mxu0 %v1142
        %v1234 = vpop.f32.mrb[0].mxu0
        %v1235 = vadd.f32 %v1133, %v1234
        %v1236 = vpop.f32.mrb[0].mxu0
        %v1237 = vadd.f32 %v1134, %v1236
        %1238 = vdwg.mxu0
        %1239 = vmatprep.subr.mxu0 %v1154
        %1240 = vmatpush1.msra.mxu0 %v1151
        %1241 = vmatprep.subr.mxu0 0.0
        %1242 = vmatpush1.msra.mxu0 0.0
        %1243 = vmatprep.subr.mxu0 0.0
        %1244 = vmatpush1.msra.mxu0 0.0
        %1245 = vmatprep.subr.mxu0 0.0
        %1246 = vmatpush1.msra.mxu0 0.0
        %1247 = vmatprep.subr.mxu0 0.0
        %1248 = vmatpush1.msra.mxu0 0.0
        %1249 = vmatprep.subr.mxu0 0.0
        %1250 = vmatpush1.msra.mxu0 0.0
        %1251 = vmatprep.subr.mxu0 0.0
        %1252 = vmatpush1.msra.mxu0 0.0
        %1253 = vmatprep.subr.mxu0 0.0
        %1254 = vmatpush1.msra.mxu0 0.0
        %1255 = vmatprep.subr.mxu0 0.0
        %1256 = vmatpush1.msra.mxu0 0.0
        %1257 = vmatprep.subr.mxu0 0.0
        %1258 = vmatpush1.msra.mxu0 0.0
        %1259 = vmatprep.subr.mxu0 0.0
        %1260 = vmatpush1.msra.mxu0 0.0
        %1261 = vmatprep.subr.mxu0 0.0
        %1262 = vmatpush1.msra.mxu0 0.0
        %1263 = vmatprep.subr.mxu0 0.0
        %1264 = vmatpush1.msra.mxu0 0.0
        %1265 = vmatprep.subr.mxu0 0.0
        %1266 = vmatpush1.msra.mxu0 0.0
        %1267 = vmatprep.subr.mxu0 0.0
        %1268 = vmatpush1.msra.mxu0 0.0
        %1269 = vmatprep.subr.mxu0 0.0
        %1270 = vmatpush1.msra.mxu0 0.0
        %1271 = vmatprep.subr.mxu0 0.0
        %1272 = vmatpush1.msra.mxu0 0.0
        %1273 = vmatprep.subr.mxu0 0.0
        %1274 = vmatpush1.msra.mxu0 0.0
        %1275 = vmatprep.subr.mxu0 0.0
        %1276 = vmatpush1.msra.mxu0 0.0
        %1277 = vmatprep.subr.mxu0 0.0
        %1278 = vmatpush1.msra.mxu0 0.0
        %1279 = vmatprep.subr.mxu0 0.0
        %1280 = vmatpush1.msra.mxu0 0.0
        %1281 = vmatprep.subr.mxu0 0.0
        %1282 = vmatpush1.msra.mxu0 0.0
        %1283 = vmatprep.subr.mxu0 0.0
        %1284 = vmatpush1.msra.mxu0 0.0
        %1285 = vmatprep.subr.mxu0 0.0
        %1286 = vmatpush1.msra.mxu0 0.0
        %1287 = vmatprep.subr.mxu0 0.0
        %1288 = vmatpush1.msra.mxu0 0.0
        %1289 = vmatprep.subr.mxu0 0.0
        %1290 = vmatpush1.msra.mxu0 0.0
        %1291 = vmatprep.subr.mxu0 0.0
        %1292 = vmatpush1.msra.mxu0 0.0
        %1293 = vmatprep.subr.mxu0 0.0
        %1294 = vmatpush1.msra.mxu0 0.0
        %1295 = vmatprep.subr.mxu0 0.0
        %1296 = vmatpush1.msra.mxu0 0.0
        %1297 = vmatprep.subr.mxu0 0.0
        %1298 = vmatpush1.msra.mxu0 0.0
        %1299 = vmatprep.subr.mxu0 0.0
        %1300 = vmatpush1.msra.mxu0 0.0
        %1301 = vmatprep.subr.mxu0 0.0
        %1302 = vmatpush1.msra.mxu0 0.0
        %1303 = vmatprep.mubr.f32.mxu0 0.0
        %1304 = vmatmul.mubr.f32.gmra.mrb[0].mxu0 %v1142
        %v1305 = vpop.f32.mrb[0].mxu0
        %v1306 = vadd.f32 %v1135, %v1305
        %v1307 = vpop.f32.mrb[0].mxu0
        %v1308 = vadd.f32 %v1136, %v1307
        %1309 = vdwg.mxu0
        %1310 = vmatprep.subr.mxu0 %v1160
        %1311 = vmatpush1.msra.mxu0 %v1157
        %1312 = vmatprep.subr.mxu0 0.0
        %1313 = vmatpush1.msra.mxu0 0.0
        %1314 = vmatprep.subr.mxu0 0.0
        %1315 = vmatpush1.msra.mxu0 0.0
        %1316 = vmatprep.subr.mxu0 0.0
        %1317 = vmatpush1.msra.mxu0 0.0
        %1318 = vmatprep.subr.mxu0 0.0
        %1319 = vmatpush1.msra.mxu0 0.0
        %1320 = vmatprep.subr.mxu0 0.0
        %1321 = vmatpush1.msra.mxu0 0.0
        %1322 = vmatprep.subr.mxu0 0.0
        %1323 = vmatpush1.msra.mxu0 0.0
        %1324 = vmatprep.subr.mxu0 0.0
        %1325 = vmatpush1.msra.mxu0 0.0
        %1326 = vmatprep.subr.mxu0 0.0
        %1327 = vmatpush1.msra.mxu0 0.0
        %1328 = vmatprep.subr.mxu0 0.0
        %1329 = vmatpush1.msra.mxu0 0.0
        %1330 = vmatprep.subr.mxu0 0.0
        %1331 = vmatpush1.msra.mxu0 0.0
        %1332 = vmatprep.subr.mxu0 0.0
        %1333 = vmatpush1.msra.mxu0 0.0
        %1334 = vmatprep.subr.mxu0 0.0
        %1335 = vmatpush1.msra.mxu0 0.0
        %1336 = vmatprep.subr.mxu0 0.0
        %1337 = vmatpush1.msra.mxu0 0.0
        %1338 = vmatprep.subr.mxu0 0.0
        %1339 = vmatpush1.msra.mxu0 0.0
        %1340 = vmatprep.subr.mxu0 0.0
        %1341 = vmatpush1.msra.mxu0 0.0
        %1342 = vmatprep.subr.mxu0 0.0
        %1343 = vmatpush1.msra.mxu0 0.0
        %1344 = vmatprep.subr.mxu0 0.0
        %1345 = vmatpush1.msra.mxu0 0.0
        %1346 = vmatprep.subr.mxu0 0.0
        %1347 = vmatpush1.msra.mxu0 0.0
        %1348 = vmatprep.subr.mxu0 0.0
        %1349 = vmatpush1.msra.mxu0 0.0
        %1350 = vmatprep.subr.mxu0 0.0
        %1351 = vmatpush1.msra.mxu0 0.0
        %1352 = vmatprep.subr.mxu0 0.0
        %1353 = vmatpush1.msra.mxu0 0.0
        %1354 = vmatprep.subr.mxu0 0.0
        %1355 = vmatpush1.msra.mxu0 0.0
        %1356 = vmatprep.subr.mxu0 0.0
        %1357 = vmatpush1.msra.mxu0 0.0
        %1358 = vmatprep.subr.mxu0 0.0
        %1359 = vmatpush1.msra.mxu0 0.0
        %1360 = vmatprep.subr.mxu0 0.0
        %1361 = vmatpush1.msra.mxu0 0.0
        %1362 = vmatprep.subr.mxu0 0.0
        %1363 = vmatpush1.msra.mxu0 0.0
        %1364 = vmatprep.subr.mxu0 0.0
        %1365 = vmatpush1.msra.mxu0 0.0
        %1366 = vmatprep.subr.mxu0 0.0
        %1367 = vmatpush1.msra.mxu0 0.0
        %1368 = vmatprep.subr.mxu0 0.0
        %1369 = vmatpush1.msra.mxu0 0.0
        %1370 = vmatprep.subr.mxu0 0.0
        %1371 = vmatpush1.msra.mxu0 0.0
        %1372 = vmatprep.subr.mxu0 0.0
        %1373 = vmatpush1.msra.mxu0 0.0
        %1374 = vmatprep.mubr.f32.mxu0 0.0
        %1375 = vmatmul.mubr.f32.gmra.mrb[0].mxu0 %v1142
        %v1376 = vpop.f32.mrb[0].mxu0
        %v1377 = vadd.f32 %v1137, %v1376
        %v1378 = vpop.f32.mrb[0].mxu0
        %v1379 = vadd.f32 %v1138, %v1378
        %1380 = vdwg.mxu0
        %1381 = vmatprep.subr.mxu0 %v1166
        %1382 = vmatpush1.msra.mxu0 %v1163
        %1383 = vmatprep.subr.mxu0 0.0
        %1384 = vmatpush1.msra.mxu0 0.0
        %1385 = vmatprep.subr.mxu0 0.0
        %1386 = vmatpush1.msra.mxu0 0.0
        %1387 = vmatprep.subr.mxu0 0.0
        %1388 = vmatpush1.msra.mxu0 0.0
        %1389 = vmatprep.subr.mxu0 0.0
        %1390 = vmatpush1.msra.mxu0 0.0
        %1391 = vmatprep.subr.mxu0 0.0
        %1392 = vmatpush1.msra.mxu0 0.0
        %1393 = vmatprep.subr.mxu0 0.0
        %1394 = vmatpush1.msra.mxu0 0.0
        %1395 = vmatprep.subr.mxu0 0.0
        %1396 = vmatpush1.msra.mxu0 0.0
        %1397 = vmatprep.subr.mxu0 0.0
        %1398 = vmatpush1.msra.mxu0 0.0
        %1399 = vmatprep.subr.mxu0 0.0
        %1400 = vmatpush1.msra.mxu0 0.0
        %1401 = vmatprep.subr.mxu0 0.0
        %1402 = vmatpush1.msra.mxu0 0.0
        %1403 = vmatprep.subr.mxu0 0.0
        %1404 = vmatpush1.msra.mxu0 0.0
        %1405 = vmatprep.subr.mxu0 0.0
        %1406 = vmatpush1.msra.mxu0 0.0
        %1407 = vmatprep.subr.mxu0 0.0
        %1408 = vmatpush1.msra.mxu0 0.0
        %1409 = vmatprep.subr.mxu0 0.0
        %1410 = vmatpush1.msra.mxu0 0.0
        %1411 = vmatprep.subr.mxu0 0.0
        %1412 = vmatpush1.msra.mxu0 0.0
        %1413 = vmatprep.subr.mxu0 0.0
        %1414 = vmatpush1.msra.mxu0 0.0
        %1415 = vmatprep.subr.mxu0 0.0
        %1416 = vmatpush1.msra.mxu0 0.0
        %1417 = vmatprep.subr.mxu0 0.0
        %1418 = vmatpush1.msra.mxu0 0.0
        %1419 = vmatprep.subr.mxu0 0.0
        %1420 = vmatpush1.msra.mxu0 0.0
        %1421 = vmatprep.subr.mxu0 0.0
        %1422 = vmatpush1.msra.mxu0 0.0
        %1423 = vmatprep.subr.mxu0 0.0
        %1424 = vmatpush1.msra.mxu0 0.0
        %1425 = vmatprep.subr.mxu0 0.0
        %1426 = vmatpush1.msra.mxu0 0.0
        %1427 = vmatprep.subr.mxu0 0.0
        %1428 = vmatpush1.msra.mxu0 0.0
        %1429 = vmatprep.subr.mxu0 0.0
        %1430 = vmatpush1.msra.mxu0 0.0
        %1431 = vmatprep.subr.mxu0 0.0
        %1432 = vmatpush1.msra.mxu0 0.0
        %1433 = vmatprep.subr.mxu0 0.0
        %1434 = vmatpush1.msra.mxu0 0.0
        %1435 = vmatprep.subr.mxu0 0.0
        %1436 = vmatpush1.msra.mxu0 0.0
        %1437 = vmatprep.subr.mxu0 0.0
        %1438 = vmatpush1.msra.mxu0 0.0
        %1439 = vmatprep.subr.mxu0 0.0
        %1440 = vmatpush1.msra.mxu0 0.0
        %1441 = vmatprep.subr.mxu0 0.0
        %1442 = vmatpush1.msra.mxu0 0.0
        %1443 = vmatprep.subr.mxu0 0.0
        %1444 = vmatpush1.msra.mxu0 0.0
        %1445 = vmatprep.mubr.f32.mxu0 0.0
        %1446 = vmatmul.mubr.f32.gmra.mrb[0].mxu0 %v1142
        %v1447 = vpop.f32.mrb[0].mxu0
        %v1448 = vadd.f32 %v1139, %v1447
        %v1449 = vpop.f32.mrb[0].mxu0
        %v1450 = vadd.f32 %v1140, %v1449
        %1451 = vdwg.mxu0
        %v1452 = vcombine.low %v1235, %v1306
        %v1453 = vcombine.high %v1235, %v1306
        %v1455 = vunpack.c.l.s4 1983009808
        %v1456 = vunpack.c.0.s8 %v1455
        %v1457 = vlaneseq
        %v1458 = vshrl.u32 %v1457, 7
        %v1459 = vsub.s32 %v1456, %v1458
        %v1460 = vrot.slane %v1452, %v1459
        %v1462 = vunpack.c.l.s4 1983009808
        %v1463 = vunpack.c.0.s8 %v1462
        %v1464 = vlaneseq
        %v1465 = vshrl.u32 %v1464, 7
        %v1466 = vsub.s32 %v1463, %v1465
        %v1467 = vrot.slane %v1453, %v1466
        %v1468 = vcombine.low %v1237, %v1308
        %v1469 = vcombine.high %v1237, %v1308
        %v1471 = vunpack.c.l.s4 1983009808
        %v1472 = vunpack.c.0.s8 %v1471
        %v1473 = vlaneseq
        %v1474 = vshrl.u32 %v1473, 7
        %v1475 = vsub.s32 %v1472, %v1474
        %v1476 = vrot.slane %v1468, %v1475
        %v1478 = vunpack.c.l.s4 1983009808
        %v1479 = vunpack.c.0.s8 %v1478
        %v1480 = vlaneseq
        %v1481 = vshrl.u32 %v1480, 7
        %v1482 = vsub.s32 %v1479, %v1481
        %v1483 = vrot.slane %v1469, %v1482
        %v1484 = vcombine.low %v1377, %v1448
        %v1485 = vcombine.high %v1377, %v1448
        %v1487 = vunpack.c.l.s4 1983009808
        %v1488 = vunpack.c.0.s8 %v1487
        %v1489 = vlaneseq
        %v1490 = vshrl.u32 %v1489, 7
        %v1491 = vsub.s32 %v1488, %v1490
        %v1492 = vrot.slane %v1484, %v1491
        %v1494 = vunpack.c.l.s4 1983009808
        %v1495 = vunpack.c.0.s8 %v1494
        %v1496 = vlaneseq
        %v1497 = vshrl.u32 %v1496, 7
        %v1498 = vsub.s32 %v1495, %v1497
        %v1499 = vrot.slane %v1485, %v1498
        %v1500 = vcombine.low %v1379, %v1450
        %v1501 = vcombine.high %v1379, %v1450
        %v1503 = vunpack.c.l.s4 1983009808
        %v1504 = vunpack.c.0.s8 %v1503
        %v1505 = vlaneseq
        %v1506 = vshrl.u32 %v1505, 7
        %v1507 = vsub.s32 %v1504, %v1506
        %v1508 = vrot.slane %v1500, %v1507
        %v1510 = vunpack.c.l.s4 1983009808
        %v1511 = vunpack.c.0.s8 %v1510
        %v1512 = vlaneseq
        %v1513 = vshrl.u32 %v1512, 7
        %v1514 = vsub.s32 %v1511, %v1513
        %v1515 = vrot.slane %v1501, %v1514
        %v1516 = vcombine.low %v1460, %v1476
        %v1517 = vcombine.high %v1460, %v1476
        %v1519 = vunpack.c.l.s4 1934713408
        %v1520 = vunpack.c.0.s8 %v1519
        %v1521 = vlaneseq
        %v1522 = vshrl.u32 %v1521, 7
        %v1523 = vsub.s32 %v1520, %v1522
        %v1524 = vrot.slane %v1516, %v1523
        %v1526 = vunpack.c.l.s4 1934713408
        %v1527 = vunpack.c.0.s8 %v1526
        %v1528 = vlaneseq
        %v1529 = vshrl.u32 %v1528, 7
        %v1530 = vsub.s32 %v1527, %v1529
        %v1531 = vrot.slane %v1517, %v1530
        %v1532 = vcombine.low %v1467, %v1483
        %v1533 = vcombine.high %v1467, %v1483
        %v1535 = vunpack.c.l.s4 1934713408
        %v1536 = vunpack.c.0.s8 %v1535
        %v1537 = vlaneseq
        %v1538 = vshrl.u32 %v1537, 7
        %v1539 = vsub.s32 %v1536, %v1538
        %v1540 = vrot.slane %v1532, %v1539
        %v1542 = vunpack.c.l.s4 1934713408
        %v1543 = vunpack.c.0.s8 %v1542
        %v1544 = vlaneseq
        %v1545 = vshrl.u32 %v1544, 7
        %v1546 = vsub.s32 %v1543, %v1545
        %v1547 = vrot.slane %v1533, %v1546
        %v1548 = vcombine.low %v1492, %v1508
        %v1549 = vcombine.high %v1492, %v1508
        %v1551 = vunpack.c.l.s4 1934713408
        %v1552 = vunpack.c.0.s8 %v1551
        %v1553 = vlaneseq
        %v1554 = vshrl.u32 %v1553, 7
        %v1555 = vsub.s32 %v1552, %v1554
        %v1556 = vrot.slane %v1548, %v1555
        %v1558 = vunpack.c.l.s4 1934713408
        %v1559 = vunpack.c.0.s8 %v1558
        %v1560 = vlaneseq
        %v1561 = vshrl.u32 %v1560, 7
        %v1562 = vsub.s32 %v1559, %v1561
        %v1563 = vrot.slane %v1549, %v1562
        %v1564 = vcombine.low %v1499, %v1515
        %v1565 = vcombine.high %v1499, %v1515
        %v1567 = vunpack.c.l.s4 1934713408
        %v1568 = vunpack.c.0.s8 %v1567
        %v1569 = vlaneseq
        %v1570 = vshrl.u32 %v1569, 7
        %v1571 = vsub.s32 %v1568, %v1570
        %v1572 = vrot.slane %v1564, %v1571
        %v1574 = vunpack.c.l.s4 1934713408
        %v1575 = vunpack.c.0.s8 %v1574
        %v1576 = vlaneseq
        %v1577 = vshrl.u32 %v1576, 7
        %v1578 = vsub.s32 %v1575, %v1577
        %v1579 = vrot.slane %v1565, %v1578
        %v1580 = vcombine.low %v1524, %v1556
        %v1581 = vcombine.high %v1524, %v1556
        %v1582 = vcombine.low %v1531, %v1563
        %v1583 = vcombine.high %v1531, %v1563
        %v1584 = vcombine.low %v1540, %v1572
        %v1585 = vcombine.high %v1540, %v1572
        %v1586 = vcombine.low %v1547, %v1579
        %v1587 = vcombine.high %v1547, %v1579
        %1588 = vmatprep.subr.mxu0 0.0
        %1589 = vmatpush1.msra.mxu0 %v248
        %1590 = vmatprep.subr.mxu0 0.0
        %1591 = vmatpush1.msra.mxu0 %v249
        %1592 = vmatprep.subr.mxu0 0.0
        %1593 = vmatpush1.msra.mxu0 %v250
        %1594 = vmatprep.subr.mxu0 0.0
        %1595 = vmatpush1.msra.mxu0 %v251
        %1596 = vmatprep.subr.mxu0 0.0
        %1597 = vmatpush1.msra.mxu0 %v252
        %1598 = vmatprep.subr.mxu0 0.0
        %1599 = vmatpush1.msra.mxu0 %v253
        %1600 = vmatprep.subr.mxu0 0.0
        %1601 = vmatpush1.msra.mxu0 %v254
        %1602 = vmatprep.subr.mxu0 0.0
        %1603 = vmatpush1.msra.mxu0 %v255
        %1604 = vmatprep.subr.mxu0 0.0
        %1605 = vmatpush1.msra.mxu0 %v256
        %1606 = vmatprep.subr.mxu0 0.0
        %1607 = vmatpush1.msra.mxu0 %v257
        %1608 = vmatprep.subr.mxu0 0.0
        %1609 = vmatpush1.msra.mxu0 %v258
        %1610 = vmatprep.subr.mxu0 0.0
        %1611 = vmatpush1.msra.mxu0 %v259
        %1612 = vmatprep.subr.mxu0 0.0
        %1613 = vmatpush1.msra.mxu0 %v260
        %1614 = vmatprep.subr.mxu0 0.0
        %1615 = vmatpush1.msra.mxu0 %v261
        %1616 = vmatprep.subr.mxu0 0.0
        %1617 = vmatpush1.msra.mxu0 %v262
        %1618 = vmatprep.subr.mxu0 0.0
        %1619 = vmatpush1.msra.mxu0 %v263
        %1620 = vmatprep.subr.mxu0 0.0
        %1621 = vmatpush1.msra.mxu0 0.0
        %1622 = vmatprep.subr.mxu0 0.0
        %1623 = vmatpush1.msra.mxu0 0.0
        %1624 = vmatprep.subr.mxu0 0.0
        %1625 = vmatpush1.msra.mxu0 0.0
        %1626 = vmatprep.subr.mxu0 0.0
        %1627 = vmatpush1.msra.mxu0 0.0
        %1628 = vmatprep.subr.mxu0 0.0
        %1629 = vmatpush1.msra.mxu0 0.0
        %1630 = vmatprep.subr.mxu0 0.0
        %1631 = vmatpush1.msra.mxu0 0.0
        %1632 = vmatprep.subr.mxu0 0.0
        %1633 = vmatpush1.msra.mxu0 0.0
        %1634 = vmatprep.subr.mxu0 0.0
        %1635 = vmatpush1.msra.mxu0 0.0
        %1636 = vmatprep.subr.mxu0 0.0
        %1637 = vmatpush1.msra.mxu0 0.0
        %1638 = vmatprep.subr.mxu0 0.0
        %1639 = vmatpush1.msra.mxu0 0.0
        %1640 = vmatprep.subr.mxu0 0.0
        %1641 = vmatpush1.msra.mxu0 0.0
        %1642 = vmatprep.subr.mxu0 0.0
        %1643 = vmatpush1.msra.mxu0 0.0
        %1644 = vmatprep.subr.mxu0 0.0
        %1645 = vmatpush1.msra.mxu0 0.0
        %1646 = vmatprep.subr.mxu0 0.0
        %1647 = vmatpush1.msra.mxu0 0.0
        %1648 = vmatprep.subr.mxu0 0.0
        %1649 = vmatpush1.msra.mxu0 0.0
        %1650 = vmatprep.subr.mxu0 0.0
        %1651 = vmatpush1.msra.mxu0 0.0
        %1652 = vmatprep.mubr.f32.mxu0 0.0
        %1653 = vmatmul.mubr.f32.gmra.mrb[0].mxu0 %v358
        %v1654 = vpop.f32.mrb[0].mxu0
        %v1655 = vadd.f32 0.0, %v1654
        %v1656 = vpop.f32.mrb[0].mxu0
        %1657 = vmatprep.mubr.f32.mxu0 0.0
        %1658 = vmatmul.mubr.f32.gmra.mrb[0].mxu0 %v359
        %v1659 = vpop.f32.mrb[0].mxu0
        %v1660 = vadd.f32 0.0, %v1659
        %v1661 = vpop.f32.mrb[0].mxu0
        %1662 = vmatprep.mubr.f32.mxu0 0.0
        %1663 = vmatmul.mubr.f32.gmra.mrb[0].mxu0 %v360
        %v1664 = vpop.f32.mrb[0].mxu0
        %v1665 = vadd.f32 0.0, %v1664
        %v1666 = vpop.f32.mrb[0].mxu0
        %1667 = vmatprep.mubr.f32.mxu0 0.0
        %1668 = vmatmul.mubr.f32.gmra.mrb[0].mxu0 %v361
        %v1669 = vpop.f32.mrb[0].mxu0
        %v1670 = vadd.f32 0.0, %v1669
        %v1671 = vpop.f32.mrb[0].mxu0
        %1672 = vdwg.mxu0
        %v1673 = vadd.f32 %v269, %v1655
        %v1674 = vadd.f32 %v270, %v1660
        %v1675 = vadd.f32 %v271, %v1665
        %v1676 = vadd.f32 %v272, %v1670
        %s1677 = scalar_lea.vmem %s1, 16
        %v1678 = vld [vmem:[%s1677] sm:$0xff]
        %v1679 = vcombine.low %v1673, %v1675
        %v1680 = vcombine.high %v1673, %v1675
        %v1682 = vunpack.c.l.s4 1983009808
        %v1683 = vunpack.c.0.s8 %v1682
        %v1684 = vlaneseq
        %v1685 = vshrl.u32 %v1684, 7
        %v1686 = vsub.s32 %v1683, %v1685
        %v1687 = vrot.slane %v1679, %v1686
        %v1689 = vunpack.c.l.s4 1983009808
        %v1690 = vunpack.c.0.s8 %v1689
        %v1691 = vlaneseq
        %v1692 = vshrl.u32 %v1691, 7
        %v1693 = vsub.s32 %v1690, %v1692
        %v1694 = vrot.slane %v1680, %v1693
        %v1695 = vcombine.low %v1674, %v1676
        %v1696 = vcombine.high %v1674, %v1676
        %v1698 = vunpack.c.l.s4 1983009808
        %v1699 = vunpack.c.0.s8 %v1698
        %v1700 = vlaneseq
        %v1701 = vshrl.u32 %v1700, 7
        %v1702 = vsub.s32 %v1699, %v1701
        %v1703 = vrot.slane %v1695, %v1702
        %v1705 = vunpack.c.l.s4 1983009808
        %v1706 = vunpack.c.0.s8 %v1705
        %v1707 = vlaneseq
        %v1708 = vshrl.u32 %v1707, 7
        %v1709 = vsub.s32 %v1706, %v1708
        %v1710 = vrot.slane %v1696, %v1709
        %v1711 = vcombine.low %v1687, %v1703
        %v1712 = vcombine.high %v1687, %v1703
        %v1714 = vunpack.c.l.s4 1934713408
        %v1715 = vunpack.c.0.s8 %v1714
        %v1716 = vlaneseq
        %v1717 = vshrl.u32 %v1716, 7
        %v1718 = vsub.s32 %v1715, %v1717
        %v1719 = vrot.slane %v1711, %v1718
        %v1721 = vunpack.c.l.s4 1934713408
        %v1722 = vunpack.c.0.s8 %v1721
        %v1723 = vlaneseq
        %v1724 = vshrl.u32 %v1723, 7
        %v1725 = vsub.s32 %v1722, %v1724
        %v1726 = vrot.slane %v1712, %v1725
        %v1727 = vcombine.low %v1694, %v1710
        %v1728 = vcombine.high %v1694, %v1710
        %v1730 = vunpack.c.l.s4 1934713408
        %v1731 = vunpack.c.0.s8 %v1730
        %v1732 = vlaneseq
        %v1733 = vshrl.u32 %v1732, 7
        %v1734 = vsub.s32 %v1731, %v1733
        %v1735 = vrot.slane %v1727, %v1734
        %v1737 = vunpack.c.l.s4 1934713408
        %v1738 = vunpack.c.0.s8 %v1737
        %v1739 = vlaneseq
        %v1740 = vshrl.u32 %v1739, 7
        %v1741 = vsub.s32 %v1738, %v1740
        %v1742 = vrot.slane %v1728, %v1741
        %v1743 = vcombine.high %v1719, 0.0
        %v1744 = vcombine.high %v1726, 0.0
        %v1745 = vcombine.high %v1735, 0.0
        %v1746 = vcombine.high %v1742, 0.0
        %v1748 = vsel %vm488, %v1678, 0
        %v1751 = vsel %vm492, %v1719, 0
        %v1754 = vsel %vm492, %v1743, 0
        %v1757 = vsel %vm492, %v1726, 0
        %v1760 = vsel %vm492, %v1744, 0
        %v1763 = vsel %vm492, %v1735, 0
        %v1766 = vsel %vm492, %v1745, 0
        %v1769 = vsel %vm492, %v1742, 0
        %v1772 = vsel %vm492, %v1746, 0
        %1774 = vmatprep.subr.mxu0 %v1754
        %1775 = vmatpush1.msra.mxu0 %v1751
        %1776 = vmatprep.subr.mxu0 0.0
        %1777 = vmatpush1.msra.mxu0 0.0
        %1778 = vmatprep.subr.mxu0 0.0
        %1779 = vmatpush1.msra.mxu0 0.0
        %1780 = vmatprep.subr.mxu0 0.0
        %1781 = vmatpush1.msra.mxu0 0.0
        %1782 = vmatprep.subr.mxu0 0.0
        %1783 = vmatpush1.msra.mxu0 0.0
        %1784 = vmatprep.subr.mxu0 0.0
        %1785 = vmatpush1.msra.mxu0 0.0
        %1786 = vmatprep.subr.mxu0 0.0
        %1787 = vmatpush1.msra.mxu0 0.0
        %1788 = vmatprep.subr.mxu0 0.0
        %1789 = vmatpush1.msra.mxu0 0.0
        %1790 = vmatprep.subr.mxu0 0.0
        %1791 = vmatpush1.msra.mxu0 0.0
        %1792 = vmatprep.subr.mxu0 0.0
        %1793 = vmatpush1.msra.mxu0 0.0
        %1794 = vmatprep.subr.mxu0 0.0
        %1795 = vmatpush1.msra.mxu0 0.0
        %1796 = vmatprep.subr.mxu0 0.0
        %1797 = vmatpush1.msra.mxu0 0.0
        %1798 = vmatprep.subr.mxu0 0.0
        %1799 = vmatpush1.msra.mxu0 0.0
        %1800 = vmatprep.subr.mxu0 0.0
        %1801 = vmatpush1.msra.mxu0 0.0
        %1802 = vmatprep.subr.mxu0 0.0
        %1803 = vmatpush1.msra.mxu0 0.0
        %1804 = vmatprep.subr.mxu0 0.0
        %1805 = vmatpush1.msra.mxu0 0.0
        %1806 = vmatprep.subr.mxu0 0.0
        %1807 = vmatpush1.msra.mxu0 0.0
        %1808 = vmatprep.subr.mxu0 0.0
        %1809 = vmatpush1.msra.mxu0 0.0
        %1810 = vmatprep.subr.mxu0 0.0
        %1811 = vmatpush1.msra.mxu0 0.0
        %1812 = vmatprep.subr.mxu0 0.0
        %1813 = vmatpush1.msra.mxu0 0.0
        %1814 = vmatprep.subr.mxu0 0.0
        %1815 = vmatpush1.msra.mxu0 0.0
        %1816 = vmatprep.subr.mxu0 0.0
        %1817 = vmatpush1.msra.mxu0 0.0
        %1818 = vmatprep.subr.mxu0 0.0
        %1819 = vmatpush1.msra.mxu0 0.0
        %1820 = vmatprep.subr.mxu0 0.0
        %1821 = vmatpush1.msra.mxu0 0.0
        %1822 = vmatprep.subr.mxu0 0.0
        %1823 = vmatpush1.msra.mxu0 0.0
        %1824 = vmatprep.subr.mxu0 0.0
        %1825 = vmatpush1.msra.mxu0 0.0
        %1826 = vmatprep.subr.mxu0 0.0
        %1827 = vmatpush1.msra.mxu0 0.0
        %1828 = vmatprep.subr.mxu0 0.0
        %1829 = vmatpush1.msra.mxu0 0.0
        %1830 = vmatprep.subr.mxu0 0.0
        %1831 = vmatpush1.msra.mxu0 0.0
        %1832 = vmatprep.subr.mxu0 0.0
        %1833 = vmatpush1.msra.mxu0 0.0
        %1834 = vmatprep.subr.mxu0 0.0
        %1835 = vmatpush1.msra.mxu0 0.0
        %1836 = vmatprep.subr.mxu0 0.0
        %1837 = vmatpush1.msra.mxu0 0.0
        %1838 = vmatprep.mubr.f32.mxu0 0.0
        %1839 = vmatmul.mubr.f32.gmra.mrb[0].mxu0 %v1748
        %v1840 = vpop.f32.mrb[0].mxu0
        %v1841 = vadd.f32 %v480, %v1840
        %v1842 = vpop.f32.mrb[0].mxu0
        %v1843 = vadd.f32 %v481, %v1842
        %1844 = vdwg.mxu0
        %1845 = vmatprep.subr.mxu0 %v1760
        %1846 = vmatpush1.msra.mxu0 %v1757
        %1847 = vmatprep.subr.mxu0 0.0
        %1848 = vmatpush1.msra.mxu0 0.0
        %1849 = vmatprep.subr.mxu0 0.0
        %1850 = vmatpush1.msra.mxu0 0.0
        %1851 = vmatprep.subr.mxu0 0.0
        %1852 = vmatpush1.msra.mxu0 0.0
        %1853 = vmatprep.subr.mxu0 0.0
        %1854 = vmatpush1.msra.mxu0 0.0
        %1855 = vmatprep.subr.mxu0 0.0
        %1856 = vmatpush1.msra.mxu0 0.0
        %1857 = vmatprep.subr.mxu0 0.0
        %1858 = vmatpush1.msra.mxu0 0.0
        %1859 = vmatprep.subr.mxu0 0.0
        %1860 = vmatpush1.msra.mxu0 0.0
        %1861 = vmatprep.subr.mxu0 0.0
        %1862 = vmatpush1.msra.mxu0 0.0
        %1863 = vmatprep.subr.mxu0 0.0
        %1864 = vmatpush1.msra.mxu0 0.0
        %1865 = vmatprep.subr.mxu0 0.0
        %1866 = vmatpush1.msra.mxu0 0.0
        %1867 = vmatprep.subr.mxu0 0.0
        %1868 = vmatpush1.msra.mxu0 0.0
        %1869 = vmatprep.subr.mxu0 0.0
        %1870 = vmatpush1.msra.mxu0 0.0
        %1871 = vmatprep.subr.mxu0 0.0
        %1872 = vmatpush1.msra.mxu0 0.0
        %1873 = vmatprep.subr.mxu0 0.0
        %1874 = vmatpush1.msra.mxu0 0.0
        %1875 = vmatprep.subr.mxu0 0.0
        %1876 = vmatpush1.msra.mxu0 0.0
        %1877 = vmatprep.subr.mxu0 0.0
        %1878 = vmatpush1.msra.mxu0 0.0
        %1879 = vmatprep.subr.mxu0 0.0
        %1880 = vmatpush1.msra.mxu0 0.0
        %1881 = vmatprep.subr.mxu0 0.0
        %1882 = vmatpush1.msra.mxu0 0.0
        %1883 = vmatprep.subr.mxu0 0.0
        %1884 = vmatpush1.msra.mxu0 0.0
        %1885 = vmatprep.subr.mxu0 0.0
        %1886 = vmatpush1.msra.mxu0 0.0
        %1887 = vmatprep.subr.mxu0 0.0
        %1888 = vmatpush1.msra.mxu0 0.0
        %1889 = vmatprep.subr.mxu0 0.0
        %1890 = vmatpush1.msra.mxu0 0.0
        %1891 = vmatprep.subr.mxu0 0.0
        %1892 = vmatpush1.msra.mxu0 0.0
        %1893 = vmatprep.subr.mxu0 0.0
        %1894 = vmatpush1.msra.mxu0 0.0
        %1895 = vmatprep.subr.mxu0 0.0
        %1896 = vmatpush1.msra.mxu0 0.0
        %1897 = vmatprep.subr.mxu0 0.0
        %1898 = vmatpush1.msra.mxu0 0.0
        %1899 = vmatprep.subr.mxu0 0.0
        %1900 = vmatpush1.msra.mxu0 0.0
        %1901 = vmatprep.subr.mxu0 0.0
        %1902 = vmatpush1.msra.mxu0 0.0
        %1903 = vmatprep.subr.mxu0 0.0
        %1904 = vmatpush1.msra.mxu0 0.0
        %1905 = vmatprep.subr.mxu0 0.0
        %1906 = vmatpush1.msra.mxu0 0.0
        %1907 = vmatprep.subr.mxu0 0.0
        %1908 = vmatpush1.msra.mxu0 0.0
        %1909 = vmatprep.mubr.f32.mxu0 0.0
        %1910 = vmatmul.mubr.f32.gmra.mrb[0].mxu0 %v1748
        %v1911 = vpop.f32.mrb[0].mxu0
        %v1912 = vadd.f32 %v482, %v1911
        %v1913 = vpop.f32.mrb[0].mxu0
        %v1914 = vadd.f32 %v483, %v1913
        %1915 = vdwg.mxu0
        %1916 = vmatprep.subr.mxu0 %v1766
        %1917 = vmatpush1.msra.mxu0 %v1763
        %1918 = vmatprep.subr.mxu0 0.0
        %1919 = vmatpush1.msra.mxu0 0.0
        %1920 = vmatprep.subr.mxu0 0.0
        %1921 = vmatpush1.msra.mxu0 0.0
        %1922 = vmatprep.subr.mxu0 0.0
        %1923 = vmatpush1.msra.mxu0 0.0
        %1924 = vmatprep.subr.mxu0 0.0
        %1925 = vmatpush1.msra.mxu0 0.0
        %1926 = vmatprep.subr.mxu0 0.0
        %1927 = vmatpush1.msra.mxu0 0.0
        %1928 = vmatprep.subr.mxu0 0.0
        %1929 = vmatpush1.msra.mxu0 0.0
        %1930 = vmatprep.subr.mxu0 0.0
        %1931 = vmatpush1.msra.mxu0 0.0
        %1932 = vmatprep.subr.mxu0 0.0
        %1933 = vmatpush1.msra.mxu0 0.0
        %1934 = vmatprep.subr.mxu0 0.0
        %1935 = vmatpush1.msra.mxu0 0.0
        %1936 = vmatprep.subr.mxu0 0.0
        %1937 = vmatpush1.msra.mxu0 0.0
        %1938 = vmatprep.subr.mxu0 0.0
        %1939 = vmatpush1.msra.mxu0 0.0
        %1940 = vmatprep.subr.mxu0 0.0
        %1941 = vmatpush1.msra.mxu0 0.0
        %1942 = vmatprep.subr.mxu0 0.0
        %1943 = vmatpush1.msra.mxu0 0.0
        %1944 = vmatprep.subr.mxu0 0.0
        %1945 = vmatpush1.msra.mxu0 0.0
        %1946 = vmatprep.subr.mxu0 0.0
        %1947 = vmatpush1.msra.mxu0 0.0
        %1948 = vmatprep.subr.mxu0 0.0
        %1949 = vmatpush1.msra.mxu0 0.0
        %1950 = vmatprep.subr.mxu0 0.0
        %1951 = vmatpush1.msra.mxu0 0.0
        %1952 = vmatprep.subr.mxu0 0.0
        %1953 = vmatpush1.msra.mxu0 0.0
        %1954 = vmatprep.subr.mxu0 0.0
        %1955 = vmatpush1.msra.mxu0 0.0
        %1956 = vmatprep.subr.mxu0 0.0
        %1957 = vmatpush1.msra.mxu0 0.0
        %1958 = vmatprep.subr.mxu0 0.0
        %1959 = vmatpush1.msra.mxu0 0.0
        %1960 = vmatprep.subr.mxu0 0.0
        %1961 = vmatpush1.msra.mxu0 0.0
        %1962 = vmatprep.subr.mxu0 0.0
        %1963 = vmatpush1.msra.mxu0 0.0
        %1964 = vmatprep.subr.mxu0 0.0
        %1965 = vmatpush1.msra.mxu0 0.0
        %1966 = vmatprep.subr.mxu0 0.0
        %1967 = vmatpush1.msra.mxu0 0.0
        %1968 = vmatprep.subr.mxu0 0.0
        %1969 = vmatpush1.msra.mxu0 0.0
        %1970 = vmatprep.subr.mxu0 0.0
        %1971 = vmatpush1.msra.mxu0 0.0
        %1972 = vmatprep.subr.mxu0 0.0
        %1973 = vmatpush1.msra.mxu0 0.0
        %1974 = vmatprep.subr.mxu0 0.0
        %1975 = vmatpush1.msra.mxu0 0.0
        %1976 = vmatprep.subr.mxu0 0.0
        %1977 = vmatpush1.msra.mxu0 0.0
        %1978 = vmatprep.subr.mxu0 0.0
        %1979 = vmatpush1.msra.mxu0 0.0
        %1980 = vmatprep.mubr.f32.mxu0 0.0
        %1981 = vmatmul.mubr.f32.gmra.mrb[0].mxu0 %v1748
        %v1982 = vpop.f32.mrb[0].mxu0
        %v1983 = vadd.f32 %v484, %v1982
        %v1984 = vpop.f32.mrb[0].mxu0
        %v1985 = vadd.f32 %v485, %v1984
        %1986 = vdwg.mxu0
        %1987 = vmatprep.subr.mxu0 %v1772
        %1988 = vmatpush1.msra.mxu0 %v1769
        %1989 = vmatprep.subr.mxu0 0.0
        %1990 = vmatpush1.msra.mxu0 0.0
        %1991 = vmatprep.subr.mxu0 0.0
        %1992 = vmatpush1.msra.mxu0 0.0
        %1993 = vmatprep.subr.mxu0 0.0
        %1994 = vmatpush1.msra.mxu0 0.0
        %1995 = vmatprep.subr.mxu0 0.0
        %1996 = vmatpush1.msra.mxu0 0.0
        %1997 = vmatprep.subr.mxu0 0.0
        %1998 = vmatpush1.msra.mxu0 0.0
        %1999 = vmatprep.subr.mxu0 0.0
        %2000 = vmatpush1.msra.mxu0 0.0
        %2001 = vmatprep.subr.mxu0 0.0
        %2002 = vmatpush1.msra.mxu0 0.0
        %2003 = vmatprep.subr.mxu0 0.0
        %2004 = vmatpush1.msra.mxu0 0.0
        %2005 = vmatprep.subr.mxu0 0.0
        %2006 = vmatpush1.msra.mxu0 0.0
        %2007 = vmatprep.subr.mxu0 0.0
        %2008 = vmatpush1.msra.mxu0 0.0
        %2009 = vmatprep.subr.mxu0 0.0
        %2010 = vmatpush1.msra.mxu0 0.0
        %2011 = vmatprep.subr.mxu0 0.0
        %2012 = vmatpush1.msra.mxu0 0.0
        %2013 = vmatprep.subr.mxu0 0.0
        %2014 = vmatpush1.msra.mxu0 0.0
        %2015 = vmatprep.subr.mxu0 0.0
        %2016 = vmatpush1.msra.mxu0 0.0
        %2017 = vmatprep.subr.mxu0 0.0
        %2018 = vmatpush1.msra.mxu0 0.0
        %2019 = vmatprep.subr.mxu0 0.0
        %2020 = vmatpush1.msra.mxu0 0.0
        %2021 = vmatprep.subr.mxu0 0.0
        %2022 = vmatpush1.msra.mxu0 0.0
        %2023 = vmatprep.subr.mxu0 0.0
        %2024 = vmatpush1.msra.mxu0 0.0
        %2025 = vmatprep.subr.mxu0 0.0
        %2026 = vmatpush1.msra.mxu0 0.0
        %2027 = vmatprep.subr.mxu0 0.0
        %2028 = vmatpush1.msra.mxu0 0.0
        %2029 = vmatprep.subr.mxu0 0.0
        %2030 = vmatpush1.msra.mxu0 0.0
        %2031 = vmatprep.subr.mxu0 0.0
        %2032 = vmatpush1.msra.mxu0 0.0
        %2033 = vmatprep.subr.mxu0 0.0
        %2034 = vmatpush1.msra.mxu0 0.0
        %2035 = vmatprep.subr.mxu0 0.0
        %2036 = vmatpush1.msra.mxu0 0.0
        %2037 = vmatprep.subr.mxu0 0.0
        %2038 = vmatpush1.msra.mxu0 0.0
        %2039 = vmatprep.subr.mxu0 0.0
        %2040 = vmatpush1.msra.mxu0 0.0
        %2041 = vmatprep.subr.mxu0 0.0
        %2042 = vmatpush1.msra.mxu0 0.0
        %2043 = vmatprep.subr.mxu0 0.0
        %2044 = vmatpush1.msra.mxu0 0.0
        %2045 = vmatprep.subr.mxu0 0.0
        %2046 = vmatpush1.msra.mxu0 0.0
        %2047 = vmatprep.subr.mxu0 0.0
        %2048 = vmatpush1.msra.mxu0 0.0
        %2049 = vmatprep.subr.mxu0 0.0
        %2050 = vmatpush1.msra.mxu0 0.0
        %2051 = vmatprep.mubr.f32.mxu0 0.0
        %2052 = vmatmul.mubr.f32.gmra.mrb[0].mxu0 %v1748
        %v2053 = vpop.f32.mrb[0].mxu0
        %v2054 = vadd.f32 %v486, %v2053
        %v2055 = vpop.f32.mrb[0].mxu0
        %v2056 = vadd.f32 %v487, %v2055
        %2057 = vdwg.mxu0
        %v2058 = vcombine.low %v1841, %v1912
        %v2059 = vcombine.high %v1841, %v1912
        %v2061 = vunpack.c.l.s4 1983009808
        %v2062 = vunpack.c.0.s8 %v2061
        %v2063 = vlaneseq
        %v2064 = vshrl.u32 %v2063, 7
        %v2065 = vsub.s32 %v2062, %v2064
        %v2066 = vrot.slane %v2058, %v2065
        %v2068 = vunpack.c.l.s4 1983009808
        %v2069 = vunpack.c.0.s8 %v2068
        %v2070 = vlaneseq
        %v2071 = vshrl.u32 %v2070, 7
        %v2072 = vsub.s32 %v2069, %v2071
        %v2073 = vrot.slane %v2059, %v2072
        %v2074 = vcombine.low %v1843, %v1914
        %v2075 = vcombine.high %v1843, %v1914
        %v2077 = vunpack.c.l.s4 1983009808
        %v2078 = vunpack.c.0.s8 %v2077
        %v2079 = vlaneseq
        %v2080 = vshrl.u32 %v2079, 7
        %v2081 = vsub.s32 %v2078, %v2080
        %v2082 = vrot.slane %v2074, %v2081
        %v2084 = vunpack.c.l.s4 1983009808
        %v2085 = vunpack.c.0.s8 %v2084
        %v2086 = vlaneseq
        %v2087 = vshrl.u32 %v2086, 7
        %v2088 = vsub.s32 %v2085, %v2087
        %v2089 = vrot.slane %v2075, %v2088
        %v2090 = vcombine.low %v1983, %v2054
        %v2091 = vcombine.high %v1983, %v2054
        %v2093 = vunpack.c.l.s4 1983009808
        %v2094 = vunpack.c.0.s8 %v2093
        %v2095 = vlaneseq
        %v2096 = vshrl.u32 %v2095, 7
        %v2097 = vsub.s32 %v2094, %v2096
        %v2098 = vrot.slane %v2090, %v2097
        %v2100 = vunpack.c.l.s4 1983009808
        %v2101 = vunpack.c.0.s8 %v2100
        %v2102 = vlaneseq
        %v2103 = vshrl.u32 %v2102, 7
        %v2104 = vsub.s32 %v2101, %v2103
        %v2105 = vrot.slane %v2091, %v2104
        %v2106 = vcombine.low %v1985, %v2056
        %v2107 = vcombine.high %v1985, %v2056
        %v2109 = vunpack.c.l.s4 1983009808
        %v2110 = vunpack.c.0.s8 %v2109
        %v2111 = vlaneseq
        %v2112 = vshrl.u32 %v2111, 7
        %v2113 = vsub.s32 %v2110, %v2112
        %v2114 = vrot.slane %v2106, %v2113
        %v2116 = vunpack.c.l.s4 1983009808
        %v2117 = vunpack.c.0.s8 %v2116
        %v2118 = vlaneseq
        %v2119 = vshrl.u32 %v2118, 7
        %v2120 = vsub.s32 %v2117, %v2119
        %v2121 = vrot.slane %v2107, %v2120
        %v2122 = vcombine.low %v2066, %v2082
        %v2123 = vcombine.high %v2066, %v2082
        %v2125 = vunpack.c.l.s4 1934713408
        %v2126 = vunpack.c.0.s8 %v2125
        %v2127 = vlaneseq
        %v2128 = vshrl.u32 %v2127, 7
        %v2129 = vsub.s32 %v2126, %v2128
        %v2130 = vrot.slane %v2122, %v2129
        %v2132 = vunpack.c.l.s4 1934713408
        %v2133 = vunpack.c.0.s8 %v2132
        %v2134 = vlaneseq
        %v2135 = vshrl.u32 %v2134, 7
        %v2136 = vsub.s32 %v2133, %v2135
        %v2137 = vrot.slane %v2123, %v2136
        %v2138 = vcombine.low %v2073, %v2089
        %v2139 = vcombine.high %v2073, %v2089
        %v2141 = vunpack.c.l.s4 1934713408
        %v2142 = vunpack.c.0.s8 %v2141
        %v2143 = vlaneseq
        %v2144 = vshrl.u32 %v2143, 7
        %v2145 = vsub.s32 %v2142, %v2144
        %v2146 = vrot.slane %v2138, %v2145
        %v2148 = vunpack.c.l.s4 1934713408
        %v2149 = vunpack.c.0.s8 %v2148
        %v2150 = vlaneseq
        %v2151 = vshrl.u32 %v2150, 7
        %v2152 = vsub.s32 %v2149, %v2151
        %v2153 = vrot.slane %v2139, %v2152
        %v2154 = vcombine.low %v2098, %v2114
        %v2155 = vcombine.high %v2098, %v2114
        %v2157 = vunpack.c.l.s4 1934713408
        %v2158 = vunpack.c.0.s8 %v2157
        %v2159 = vlaneseq
        %v2160 = vshrl.u32 %v2159, 7
        %v2161 = vsub.s32 %v2158, %v2160
        %v2162 = vrot.slane %v2154, %v2161
        %v2164 = vunpack.c.l.s4 1934713408
        %v2165 = vunpack.c.0.s8 %v2164
        %v2166 = vlaneseq
        %v2167 = vshrl.u32 %v2166, 7
        %v2168 = vsub.s32 %v2165, %v2167
        %v2169 = vrot.slane %v2155, %v2168
        %v2170 = vcombine.low %v2105, %v2121
        %v2171 = vcombine.high %v2105, %v2121
        %v2173 = vunpack.c.l.s4 1934713408
        %v2174 = vunpack.c.0.s8 %v2173
        %v2175 = vlaneseq
        %v2176 = vshrl.u32 %v2175, 7
        %v2177 = vsub.s32 %v2174, %v2176
        %v2178 = vrot.slane %v2170, %v2177
        %v2180 = vunpack.c.l.s4 1934713408
        %v2181 = vunpack.c.0.s8 %v2180
        %v2182 = vlaneseq
        %v2183 = vshrl.u32 %v2182, 7
        %v2184 = vsub.s32 %v2181, %v2183
        %v2185 = vrot.slane %v2171, %v2184
        %v2186 = vcombine.low %v2130, %v2162
        %v2187 = vcombine.high %v2130, %v2162
        %v2188 = vcombine.low %v2137, %v2169
        %v2189 = vcombine.high %v2137, %v2169
        %v2190 = vcombine.low %v2146, %v2178
        %v2191 = vcombine.high %v2146, %v2178
        %v2192 = vcombine.low %v2153, %v2185
        %v2193 = vcombine.high %v2153, %v2185
        %v2194 = vadd.f32 %v1580, %v2186
        %v2195 = vadd.f32 %v1581, %v2187
        %v2196 = vadd.f32 %v1582, %v2188
        %v2197 = vadd.f32 %v1583, %v2189
        %v2198 = vadd.f32 %v1584, %v2190
        %v2199 = vadd.f32 %v1585, %v2191
        %v2200 = vadd.f32 %v1586, %v2192
        %v2201 = vadd.f32 %v1587, %v2193
        %v2202 = vld [vmem:[%s2] sm:$0xff]
        %v2204 = vcombine.high %v2202, %v2202
        %v2206 = vunpack.c.l.s4 1966171168
        %v2207 = vunpack.c.0.s8 %v2206
        %v2208 = vlaneseq
        %v2209 = vshrl.u32 %v2208, 7
        %v2210 = vsub.s32 %v2207, %v2209
        %v2211 = vrot.slane %v2202, %v2210
        %v2213 = vunpack.c.l.s4 1966171168
        %v2214 = vunpack.c.0.s8 %v2213
        %v2215 = vlaneseq
        %v2216 = vshrl.u32 %v2215, 7
        %v2217 = vsub.s32 %v2214, %v2216
        %v2218 = vrot.slane %v2204, %v2217
        %v2219 = vcombine.high %v2211, %v2211
        %v2220 = vcombine.high %v2218, %v2218
        %v2222 = vunpack.c.l.s4 1966171168
        %v2223 = vunpack.c.0.s8 %v2222
        %v2224 = vlaneseq
        %v2225 = vshrl.u32 %v2224, 7
        %v2226 = vsub.s32 %v2223, %v2225
        %v2227 = vrot.slane %v2211, %v2226
        %v2229 = vunpack.c.l.s4 1966171168
        %v2230 = vunpack.c.0.s8 %v2229
        %v2231 = vlaneseq
        %v2232 = vshrl.u32 %v2231, 7
        %v2233 = vsub.s32 %v2230, %v2232
        %v2234 = vrot.slane %v2218, %v2233
        %v2236 = vunpack.c.l.s4 1966171168
        %v2237 = vunpack.c.0.s8 %v2236
        %v2238 = vlaneseq
        %v2239 = vshrl.u32 %v2238, 7
        %v2240 = vsub.s32 %v2237, %v2239
        %v2241 = vrot.slane %v2219, %v2240
        %v2243 = vunpack.c.l.s4 1966171168
        %v2244 = vunpack.c.0.s8 %v2243
        %v2245 = vlaneseq
        %v2246 = vshrl.u32 %v2245, 7
        %v2247 = vsub.s32 %v2244, %v2246
        %v2248 = vrot.slane %v2220, %v2247
        %v2249 = vcombine.high %v2227, %v2227
        %v2250 = vcombine.high %v2234, %v2234
        %v2251 = vcombine.high %v2241, %v2241
        %v2252 = vcombine.high %v2248, %v2248
        %v2253 = vlaneseq
        %v2254 = vshrl.u32 %v2253, 7
        %v2255 = vsub.s32 0, %v2254
        %v2256 = vrot.slane %v2227, %v2255
        %v2257 = vlaneseq
        %v2258 = vshrl.u32 %v2257, 7
        %v2259 = vsub.s32 0, %v2258
        %v2260 = vrot.slane %v2241, %v2259
        %v2261 = vlaneseq
        %v2262 = vshrl.u32 %v2261, 7
        %v2263 = vsub.s32 0, %v2262
        %v2264 = vrot.slane %v2249, %v2263
        %v2265 = vlaneseq
        %v2266 = vshrl.u32 %v2265, 7
        %v2267 = vsub.s32 0, %v2266
        %v2268 = vrot.slane %v2251, %v2267
        %v2269 = vlaneseq
        %v2270 = vshrl.u32 %v2269, 7
        %v2271 = vsub.s32 0, %v2270
        %v2272 = vrot.slane %v2234, %v2271
        %v2273 = vlaneseq
        %v2274 = vshrl.u32 %v2273, 7
        %v2275 = vsub.s32 0, %v2274
        %v2276 = vrot.slane %v2248, %v2275
        %v2277 = vlaneseq
        %v2278 = vshrl.u32 %v2277, 7
        %v2279 = vsub.s32 0, %v2278
        %v2280 = vrot.slane %v2250, %v2279
        %v2281 = vlaneseq
        %v2282 = vshrl.u32 %v2281, 7
        %v2283 = vsub.s32 0, %v2282
        %v2284 = vrot.slane %v2252, %v2283
        %2285 = vset.pattern.permute.xlu0 0
        %2286 = vperm.xlu0 %2285, %v2256
        %v2287 = vpop.permute.xlu0 %2286
        %2289 = vset.pattern.permute.xlu0 0
        %2290 = vperm.xlu0 %2289, %v2260
        %v2291 = vpop.permute.xlu0 %2290
        %2293 = vset.pattern.permute.xlu0 0
        %2294 = vperm.xlu0 %2293, %v2264
        %v2295 = vpop.permute.xlu0 %2294
        %2297 = vset.pattern.permute.xlu0 0
        %2298 = vperm.xlu0 %2297, %v2268
        %v2299 = vpop.permute.xlu0 %2298
        %2301 = vset.pattern.permute.xlu0 0
        %2302 = vperm.xlu0 %2301, %v2272
        %v2303 = vpop.permute.xlu0 %2302
        %2305 = vset.pattern.permute.xlu0 0
        %2306 = vperm.xlu0 %2305, %v2276
        %v2307 = vpop.permute.xlu0 %2306
        %2309 = vset.pattern.permute.xlu0 0
        %2310 = vperm.xlu0 %2309, %v2280
        %v2311 = vpop.permute.xlu0 %2310
        %2313 = vset.pattern.permute.xlu0 0
        %2314 = vperm.xlu0 %2313, %v2284
        %v2315 = vpop.permute.xlu0 %2314
        %v2317 = vadd.f32 %v2194, %v2287
        %v2318 = vadd.f32 %v2195, %v2291
        %v2319 = vadd.f32 %v2196, %v2295
        %v2320 = vadd.f32 %v2197, %v2299
        %v2321 = vadd.f32 %v2198, %v2303
        %v2322 = vadd.f32 %v2199, %v2307
        %v2323 = vadd.f32 %v2200, %v2311
        %v2324 = vadd.f32 %v2201, %v2315
        %2325 = vst [vmem:[%s247] sm:$0xff] %v2317
        %2326 = vst [vmem:[%s247 + $0x8] sm:$0xff] %v2318
        %2327 = vst [vmem:[%s247 + $0x10] sm:$0xff] %v2319
        %2328 = vst [vmem:[%s247 + $0x18] sm:$0xff] %v2320
        %2329 = vst [vmem:[%s247 + $0x20] sm:$0xff] %v2321
        %2330 = vst [vmem:[%s247 + $0x28] sm:$0xff] %v2322
        %2331 = vst [vmem:[%s247 + $0x30] sm:$0xff] %v2323
        %2332 = vst [vmem:[%s247 + $0x38] sm:$0xff] %v2324
        %s2333 = sand.u32 %s135, 1
        %s2334 = scalar_lea.sflag [#allocation4], %s2333
        %s2335 = sand.u32 %s135, 1
        %s2336 = smul.addr %s2335, 64
        %s2337 = scalar_lea.vmem [#allocation7], %s2336
        // Predicated region
        $region45: #{tpu_custom_call.1} parent=35 // pred_check
          %p2338 = pneg %p145
        $region46: #{tpu_custom_call.1} parent=35 // pred_check_branch
          %2340 = sbr.rel (%p2338) target = $region48
        $region47: #{tpu_custom_call.1} parent=35 // pred_region
          %s2342 = ssub.s32 1024, 1024
          %2343 = vsyncadd %s2334, %s2342
          %s2344 = smul.addr %s26, 8
          %s2345 = sadd.s32 %s27, %s2344
          %s2346 = smul.addr %s2345, 128
          %s2347 = scalar_lea.hbm %s4, %s2346
          %s2348 = sshll.u32 %s2337, 4
          %s2349 = int_to_ptr.vmem [resolvable:$true] %s2348
          %2354 = dma.vmem_to_hbm [thread:$0]  %s2349, 1024, %s2347, %s2334, 128, 128, 8
        $region48: #{tpu_custom_call.1} parent=35 // pred_fallthru
          _
      $region36: #{tpu_custom_call.1} parent=5 // pred_fallthru
        _
      %p2355 = scmp.le.s32.totalorder 2, %s17
      // Predicated region
      $region49: #{tpu_custom_call.1} parent=5 // pred_check
        %p2356 = pneg %p2355
      $region50: #{tpu_custom_call.1} parent=5 // pred_check_branch
        %2358 = sbr.rel (%p2356) target = $region52
      $region51: #{tpu_custom_call.1} parent=5 // pred_region
        %s2359 = ssub.s32 %s17, 2
        // Predicated region
        $region53: #{tpu_custom_call.1} parent=51 // pred_check
          %p2360 = pneg %p151
        $region54: #{tpu_custom_call.1} parent=51 // pred_check_branch
          %2362 = sbr.rel (%p2360) target = $region56
        $region55: #{tpu_custom_call.1} parent=51 // pred_region
          %s2363 = sand.u32 %s136, 1
          %s2364 = scalar_lea.sflag [#allocation4], %s2363
          %s2365 = sand.u32 %s136, 1
          %s2366 = smul.addr %s2365, 64
          %s2367 = scalar_lea.vmem [#allocation7], %s2366
          %2368 = dma.done %s2364, 1024
        $region56: #{tpu_custom_call.1} parent=51 // pred_fallthru
          _
      $region52: #{tpu_custom_call.1} parent=5 // pred_fallthru
        _
    $region6: #{tpu_custom_call.1} parent=1 // loop_footer
      %s21 = sadd.s32 1, %s17
    $region7: #{tpu_custom_call.1} parent=1 // loop_footer_branch
      %16 = sbr.rel target = $region3
    $region8: #{tpu_custom_call.1} parent=1 // loop_exit
      _
    %2369 = vsyncpa [#allocation3], 1
    %s2370 = scalar_lea.sflag [#allocation3], 1
    %2371 = vsyncpa %s2370, 1
    %2372 = vsyncpa [#allocation6], 1
    %s2373 = scalar_lea.sflag [#allocation6], 1
    %2374 = vsyncpa %s2373, 1
    %2375 = vsyncpa [#allocation4], 1
    %s2376 = scalar_lea.sflag [#allocation4], 1
    %2377 = vsyncpa %s2376, 1

</llo_original>
